<compile_context>
chip_gen: v6e
topology: v6e:2x2x1
jax: 0.10.0
libtpu: 0.0.40
codegen_flags: <defaults>
</compile_context>

<pallas_src>
import functools
import math

import jax
import jax.numpy as jnp
from jax import lax
from jax.experimental import pallas as pl
from jax.experimental.pallas import tpu as pltpu

Z_DIM = 128
PRED_DIM = 128
HID_DIM = 1024
TEMPERATURE = 0.07
BN_EPS = 1e-5
NEG_INF = -1e30


# --------------------------------------------------------------------------- #
# Kernel 1: predictor / projector heads (whole-batch BatchNorm statistics),
# hidden dim of the projector tiled over the grid ("arbitrary" axis).
# --------------------------------------------------------------------------- #
def _heads_kernel(z_ref, ztgt_ref,
                  wp_ref, gp_ref, betp_ref,
                  w1_ref, g1_ref, bet1_ref,
                  w2_ref, g2_ref, bet2_ref,
                  zs_out, zt_out, pos_out, acc_ref, *, inv_temperature):
    """Outputs:
       zs_out : [N, D] bf16  L2-normalized predictor output, 1/temperature folded
       zt_out : [N, D] bf16  L2-normalized projector output
       pos_out: [N, 1] f32   positive logits  zs[i] . zt[(i + B) % N]
    """
    c = pl.program_id(0)           # hidden-dim chunk (reduction axis)
    nc = pl.num_programs(0)
    N = ztgt_ref.shape[0]
    B = N // 2

    def bn(x, gamma, beta):
        # training-mode BatchNorm1d: batch mean, biased variance, single pass.
        # Stats kept in f32 on the VPU (matches the f32 reference; the bf16 MXU
        # column-sum trick would cost ~0.5% in zt and blow the logit tolerance).
        mu = jnp.mean(x, axis=0, keepdims=True)
        ms = jnp.mean(x * x, axis=0, keepdims=True)
        var = jnp.maximum(ms - mu * mu, 0.0)
        scale = gamma * lax.rsqrt(var + BN_EPS)
        return x * scale + (beta - mu * scale)

    def l2norm(x):
        # F.normalize(x, dim=1): rsqrt (EUP) instead of sqrt + max + divide.
        return x * lax.rsqrt(jnp.sum(x * x, axis=1, keepdims=True) + 1e-24)

    @pl.when(c == 0)
    def _predictor_and_init():
        acc_ref[...] = jnp.zeros_like(acc_ref)
        # predictor: Linear (bias cancelled by BN) -> BN -> L2 norm, fold 1/T.
        zs = jnp.dot(z_ref[...], wp_ref[...], preferred_element_type=jnp.float32)
        zs = l2norm(bn(zs, gp_ref[...], betp_ref[...])) * inv_temperature
        zs_out[...] = zs.astype(jnp.bfloat16)

    # projector hidden chunk: Linear (bias cancelled by BN) -> BN -> ReLU,
    # then accumulate the second Linear into the resident f32 scratch.
    h = jnp.dot(ztgt_ref[...], w1_ref[...], preferred_element_type=jnp.float32)
    h = jnp.maximum(bn(h, g1_ref[...], bet1_ref[...]), 0.0)
    acc_ref[...] += jnp.dot(h.astype(jnp.bfloat16), w2_ref[...],
                            preferred_element_type=jnp.float32)

    @pl.when(c == nc - 1)
    def _finalize():
        zt = l2norm(bn(acc_ref[...], g2_ref[...], bet2_ref[...]))
        zt_b = zt.astype(jnp.bfloat16)
        zt_out[...] = zt_b
        # positive logit per row via a sublane roll (XLU) instead of an NxN mask.
        # Use the bf16-rounded values so it matches the MXU logits of kernel 2.
        zs_q = zs_out[...].astype(jnp.float32)
        zt_pos = pltpu.roll(zt_b.astype(jnp.float32), shift=B, axis=0)
        pos_out[...] = jnp.sum(zs_q * zt_pos, axis=1, keepdims=True)


# --------------------------------------------------------------------------- #
# Kernel 2: flash-style InfoNCE (online logsumexp over key tiles).
# --------------------------------------------------------------------------- #
def _infonce_kernel(pos_ref, zsT_ref, zt_ref, h_ref, m_sc, l_sc):
    i = pl.program_id(0)            # query tile (parallel -> megacore)
    j = pl.program_id(1)            # key tile  (arbitrary / sequential)
    nk = pl.num_programs(1)
    block_k = zt_ref.shape[0]
    block_q = zsT_ref.shape[1]

    @pl.when(j == 0)
    def _init():
        m_sc[...] = jnp.full(m_sc.shape, NEG_INF, m_sc.dtype)
        l_sc[...] = jnp.zeros(l_sc.shape, l_sc.dtype)

    # canonical [tk, D] x [D, tq] matmul, bf16 -> f32 accumulation
    s = jnp.dot(zt_ref[...], zsT_ref[...],
                preferred_element_type=jnp.float32)           # [tk, tq] f32

    ones_row = jnp.ones((1, block_k), jnp.bfloat16)

    def online_update(scores):
        # online (flash-style) max / logsumexp, lane-dense (1, block_q) accums.
        m_prev = m_sc[...]
        m_new = jnp.maximum(m_prev, jnp.max(scores, axis=0, keepdims=True))
        alpha = jnp.exp(m_prev - m_new)
        p = jnp.exp(scores - m_new)
        # key-axis sum on the MXU (ones-row matmul, f32 accumulation) instead of
        # a VPU reduction tree; the MXU is otherwise nearly idle here.
        psum = jnp.dot(ones_row, p.astype(jnp.bfloat16),
                       preferred_element_type=jnp.float32)     # [1, tq]
        l_sc[...] = alpha * l_sc[...] + psum
        m_sc[...] = m_new

    # Only diagonal tiles (i == j, valid since block_q == block_k) pay for the
    # self-pair mask; off-diagonal tiles skip the compare+select entirely.
    @pl.when(i == j)
    def _diag_tile():
        kk = lax.broadcasted_iota(jnp.int32, (block_k, 1), 0)
        qq = lax.broadcasted_iota(jnp.int32, (1, block_q), 1)
        online_update(jnp.where(kk == qq, NEG_INF, s))

    @pl.when(i != j)
    def _offdiag_tile():
        online_update(s)

    @pl.when(j == nk - 1)
    def _finalize():
        # CE over the 2B-1 remaining classes = logsumexp(masked) - positive.
        h_ref[...] = m_sc[...] + jnp.log(l_sc[...]) - pos_ref[...]


# --------------------------------------------------------------------------- #
# Wrapper.
# --------------------------------------------------------------------------- #
def _full_spec(shape):
    return pl.BlockSpec(shape, lambda *_: (0,) * len(shape))


def _pick_tile(n, target):
    """Largest tile <= target that divides n and is lane/sublane friendly."""
    if n <= target:
        return n
    t = (target // 128) * 128
    while t >= 128:
        if n % t == 0:
            return t
        t -= 128
    # TODO(synk): pad N up to a multiple of 128 (masked rows) so odd batch sizes
    # keep the lane-dense fast path instead of falling back to a full-extent tile.
    return n


def base_contrastive_issl_forward(z, z_tgt, params, temperature=TEMPERATURE,
                                  return_per_example=False):
    """Pallas implementation of BaseContrastiveISSL.forward -> (loss, logs)."""
    N, z_dim = z.shape
    assert N % 2 == 0 and z_tgt.shape == (N, z_dim)
    (wp, bp, gp, betp, w1, b1, g1, bet1, w2, b2, g2, bet2) = params
    del bp, b1, b2  # Linear biases are exactly cancelled by training-mode BN.
    pred_dim = wp.shape[1]
    hid_dim = w1.shape[1]
    assert w2.shape[1] == pred_dim

    # Pre-cast the MXU operands once in the wrapper (halves HBM->VMEM bytes and
    # removes in-kernel cast passes); BN affine params stay f32.
    bf = jnp.bfloat16
    head_args = (z.astype(bf), z_tgt.astype(bf),
                 wp.astype(bf), gp, betp,
                 w1.astype(bf), g1, bet1,
                 w2.astype(bf), g2, bet2)

    # ---- kernel 1: heads, hidden dim tiled over an "arbitrary" grid axis -----
    hid_chunk = _pick_tile(hid_dim, 256)
    n_hc = hid_dim // hid_chunk

    heads_cost = pl.CostEstimate(
        flops=2 * N * (z_dim * pred_dim + z_dim * hid_dim + hid_dim * pred_dim),
        transcendentals=2 * N + hid_dim + 2 * pred_dim,
        bytes_accessed=(2 * N * z_dim * 2
                        + (z_dim * pred_dim + z_dim * hid_dim + hid_dim * pred_dim) * 2
                        + (hid_dim + 2 * pred_dim) * 2 * 4
                        + 2 * N * pred_dim * 2 + N * 4))

    zs_s, zt_n, pos = pl.pallas_call(
        functools.partial(_heads_kernel,
                          inv_temperature=1.0 / float(temperature)),
        out_shape=(
            jax.ShapeDtypeStruct((N, pred_dim), jnp.bfloat16),
            jax.ShapeDtypeStruct((N, pred_dim), jnp.bfloat16),
            jax.ShapeDtypeStruct((N, 1), jnp.float32),
        ),
        grid=(n_hc,),
        in_specs=[
            pl.BlockSpec((N, z_dim), lambda c: (0, 0)),            # z (resident)
            pl.BlockSpec((N, z_dim), lambda c: (0, 0)),            # z_tgt (resident)
            pl.BlockSpec((z_dim, pred_dim), lambda c: (0, 0)),     # wp
            pl.BlockSpec((1, pred_dim), lambda c: (0, 0)),         # gp
            pl.BlockSpec((1, pred_dim), lambda c: (0, 0)),         # betp
            pl.BlockSpec((z_dim, hid_chunk), lambda c: (0, c)),    # w1 chunk
            pl.BlockSpec((1, hid_chunk), lambda c: (0, c)),        # g1 chunk
            pl.BlockSpec((1, hid_chunk), lambda c: (0, c)),        # bet1 chunk
            pl.BlockSpec((hid_chunk, pred_dim), lambda c: (c, 0)), # w2 chunk
            pl.BlockSpec((1, pred_dim), lambda c: (0, 0)),         # g2
            pl.BlockSpec((1, pred_dim), lambda c: (0, 0)),         # bet2
        ],
        out_specs=[
            pl.BlockSpec((N, pred_dim), lambda c: (0, 0)),
            pl.BlockSpec((N, pred_dim), lambda c: (0, 0)),
            pl.BlockSpec((N, 1), lambda c: (0, 0)),
        ],
        scratch_shapes=[pltpu.VMEM((N, pred_dim), jnp.float32)],   # zt accumulator
        compiler_params=pltpu.CompilerParams(
            dimension_semantics=("arbitrary",),
            vmem_limit_bytes=48 * 1024 * 1024),
        cost_estimate=heads_cost,
    )(*head_args)
    # TODO(synk): on v7x the head pass runs on one TensorCore; a size-2 leading
    # "parallel" axis splitting the hidden chunks across cores would ~2x it.

    # One-time layout plumbing (XLA): stage zs transposed so the contrastive
    # matmul is canonical [tk, D] x [D, tq]; present pos lane-dense as (1, N).
    zsT = zs_s.T                     # [D, N] bf16
    pos_row = pos.reshape(1, N)      # [1, N] f32

    # ---- kernel 2: tiled InfoNCE with online logsumexp -----------------------
    block = _pick_tile(N, 512)       # block_q == block_k (needed for i==j gating)
    grid = (N // block, N // block)
    nq = grid[0]

    nce_cost = pl.CostEstimate(
        flops=2 * N * N * pred_dim + 2 * N * N,
        transcendentals=N * N,
        bytes_accessed=N * pred_dim * 2 + nq * N * pred_dim * 2 + 2 * N * 4)

    hat_H = pl.pallas_call(
        _infonce_kernel,
        out_shape=jax.ShapeDtypeStruct((1, N), jnp.float32),
        grid=grid,
        in_specs=[
            pl.BlockSpec((1, block), lambda i, j: (0, i)),            # pos
            pl.BlockSpec((pred_dim, block), lambda i, j: (0, i)),     # zs^T
            pl.BlockSpec((block, pred_dim), lambda i, j: (j, 0)),     # zt key tile
        ],
        out_specs=pl.BlockSpec((1, block), lambda i, j: (0, i)),      # lane-dense
        scratch_shapes=[pltpu.VMEM((1, block), jnp.float32),          # running max
                        pltpu.VMEM((1, block), jnp.float32)],         # running sum
        compiler_params=pltpu.CompilerParams(
            dimension_semantics=("parallel", "arbitrary"),
            vmem_limit_bytes=32 * 1024 * 1024),
        cost_estimate=nce_cost,
    )(pos_row, zsT, zt_n)

    hat_H_mlz = hat_H[0]
    loss = hat_H_mlz.mean()

    n_classes = N - 1                # self column removed (is_self_contrastive=False)
    hat_H_m = math.log(n_classes)
    logs = dict(
        I_q_zm=hat_H_m - loss,
        hat_H_m=hat_H_m,
        n_negatives=float(n_classes),
        temperature=float(temperature),
    )
    # TODO(synk): BatchNorm running-statistics updates (training-mode side
    # effect) are not reproduced; they do not affect the forward output.
    if return_per_example:
        return loss, logs, hat_H_mlz
    return loss, logs


# --------------------------------------------------------------------------- #
# Parameters + pure-JAX reference (torch-faithful loss path) for validation.
# --------------------------------------------------------------------------- #
def init_params(key, z_dim=Z_DIM, pred_dim=PRED_DIM, hid_dim=HID_DIM):
    ks = jax.random.split(key, 9)
    wp = jax.random.normal(ks[0], (z_dim, pred_dim), jnp.float32) / math.sqrt(z_dim)
    bp = jnp.zeros((1, pred_dim), jnp.float32)
    gp = 1.0 + 0.1 * jax.random.normal(ks[1], (1, pred_dim), jnp.float32)
    betp = 0.1 * jax.random.normal(ks[2], (1, pred_dim), jnp.float32)
    w1 = jax.random.normal(ks[3], (z_dim, hid_dim), jnp.float32) / math.sqrt(z_dim)
    b1 = jnp.zeros((1, hid_dim), jnp.float32)
    g1 = 1.0 + 0.1 * jax.random.normal(ks[4], (1, hid_dim), jnp.float32)
    bet1 = 0.1 * jax.random.normal(ks[5], (1, hid_dim), jnp.float32)
    w2 = jax.random.normal(ks[6], (hid_dim, z_dim), jnp.float32) / math.sqrt(hid_dim)
    b2 = jnp.zeros((1, z_dim), jnp.float32)
    g2 = 1.0 + 0.1 * jax.random.normal(ks[7], (1, z_dim), jnp.float32)
    bet2 = 0.1 * jax.random.normal(ks[8], (1, z_dim), jnp.float32)
    return (wp, bp, gp, betp, w1, b1, g1, bet1, w2, b2, g2, bet2)


def reference_forward(z, z_tgt, params, temperature=TEMPERATURE):
    """Pure-JAX reference that follows the PyTorch loss path literally
    (diagonal removal -> [N, N-1] logits -> cross_entropy with pos_idx)."""
    (wp, bp, gp, betp, w1, b1, g1, bet1, w2, b2, g2, bet2) = params
    N = z.shape[0]
    B = N // 2

    def bn(x, gamma, beta):
        mu = x.mean(0, keepdims=True)
        var = jnp.maximum((x * x).mean(0, keepdims=True) - mu * mu, 0.0)
        scale = gamma * lax.rsqrt(var + BN_EPS)
        return x * scale + (beta - mu * scale)

    def l2norm(x):
        return x * lax.rsqrt(jnp.sum(x * x, axis=1, keepdims=True) + 1e-24)

    def mm(a, w):
        return jnp.dot(a.astype(jnp.bfloat16), w.astype(jnp.bfloat16),
                       preferred_element_type=jnp.float32)

    zs = l2norm(bn(mm(z, wp) + bp, gp, betp)) * (1.0 / temperature)
    h = jnp.maximum(bn(mm(z_tgt, w1) + b1, g1, bet1), 0.0)
    zt = l2norm(bn(mm(h, w2) + b2, g2, bet2))

    zs_q = zs.astype(jnp.bfloat16).astype(jnp.float32)
    zt_q = zt.astype(jnp.bfloat16).astype(jnp.float32)
    logits = zs_q @ zt_q.T            # temperature already folded into zs

    # logits[~eye].view(N, N-1): row r keeps columns c != r, in order.
    col = jnp.arange(N - 1)
    gather_cols = col[None, :] + (col[None, :] >= jnp.arange(N)[:, None])
    lm = jnp.take_along_axis(logits, gather_cols, axis=1)
    pos_idx = jnp.concatenate([jnp.arange(B) + B - 1, jnp.arange(B)])
    logp = jax.nn.log_softmax(lm, axis=-1)
    hat_H_mlz = -jnp.take_along_axis(logp, pos_idx[:, None], axis=1)[:, 0]
    return hat_H_mlz


if __name__ == "__main__":
    key = jax.random.PRNGKey(0)
    k_z, k_zt, k_p = jax.random.split(key, 3)

    batch_size = 4                             # new_batch_size = 2 * 4 = 8
    z = jax.random.normal(k_z, (2 * batch_size, Z_DIM), jnp.float32)
    z_tgt = jax.random.normal(k_zt, (2 * batch_size, Z_DIM), jnp.float32)
    params = init_params(k_p)

    loss, logs, hat_H = base_contrastive_issl_forward(
        z, z_tgt, params, return_per_example=True)
    loss = jax.block_until_ready(loss)

    assert loss.shape == () and bool(jnp.isfinite(loss))

    ref = reference_forward(z, z_tgt, params)
    assert bool(jnp.allclose(hat_H, ref, atol=1e-2, rtol=1e-2)), (hat_H, ref)
    assert abs(float(loss) - float(ref.mean())) < 1e-2

    print("KERNEL_OK")
</pallas_src>

<mosaic_0001>
module attributes {stable_mosaic.version = 11 : i64} {
  func.func @_heads_kernel(%arg0: i32, %arg1: memref<8x128xbf16, #tpu.memory_space<vmem>>, %arg2: memref<8x128xbf16, #tpu.memory_space<vmem>>, %arg3: memref<128x128xbf16, #tpu.memory_space<vmem>>, %arg4: memref<1x128xf32, #tpu.memory_space<vmem>>, %arg5: memref<1x128xf32, #tpu.memory_space<vmem>>, %arg6: memref<128x256xbf16, #tpu.memory_space<vmem>>, %arg7: memref<1x256xf32, #tpu.memory_space<vmem>>, %arg8: memref<1x256xf32, #tpu.memory_space<vmem>>, %arg9: memref<256x128xbf16, #tpu.memory_space<vmem>>, %arg10: memref<1x128xf32, #tpu.memory_space<vmem>>, %arg11: memref<1x128xf32, #tpu.memory_space<vmem>>, %arg12: memref<8x128xbf16, #tpu.memory_space<vmem>>, %arg13: memref<8x128xbf16, #tpu.memory_space<vmem>>, %arg14: memref<8x1xf32, #tpu.memory_space<vmem>>, %arg15: memref<8x128xf32, #tpu.memory_space<vmem>>) attributes {dimension_semantics = [#tpu.dimension_semantics<arbitrary>], iteration_bounds = array<i64: 4>, scalar_prefetch = 0 : i64, scratch_operands = 1 : i64, tpu.core_type = #tpu.core_type<tc>, window_params = [{pipeline_mode = #tpu.pipeline_mode<synchronous>, transform_indices = @transform_0, window_bounds = array<i64: 8, 128>}, {pipeline_mode = #tpu.pipeline_mode<synchronous>, transform_indices = @transform_1, window_bounds = array<i64: 8, 128>}, {pipeline_mode = #tpu.pipeline_mode<synchronous>, transform_indices = @transform_2, window_bounds = array<i64: 128, 128>}, {pipeline_mode = #tpu.pipeline_mode<synchronous>, transform_indices = @transform_3, window_bounds = array<i64: 1, 128>}, {pipeline_mode = #tpu.pipeline_mode<synchronous>, transform_indices = @transform_4, window_bounds = array<i64: 1, 128>}, {transform_indices = @transform_5, window_bounds = array<i64: 128, 256>}, {transform_indices = @transform_6, window_bounds = array<i64: 1, 256>}, {transform_indices = @transform_7, window_bounds = array<i64: 1, 256>}, {transform_indices = @transform_8, window_bounds = array<i64: 256, 128>}, {pipeline_mode = #tpu.pipeline_mode<synchronous>, transform_indices = @transform_9, window_bounds = array<i64: 1, 128>}, {pipeline_mode = #tpu.pipeline_mode<synchronous>, transform_indices = @transform_10, window_bounds = array<i64: 1, 128>}, {pipeline_mode = #tpu.pipeline_mode<synchronous>, transform_indices = @transform_11, window_bounds = array<i64: 8, 128>}, {pipeline_mode = #tpu.pipeline_mode<synchronous>, transform_indices = @transform_12, window_bounds = array<i64: 8, 128>}, {pipeline_mode = #tpu.pipeline_mode<synchronous>, transform_indices = @transform_13, window_bounds = array<i64: 8, 1>}]} {
    %c0_i32 = arith.constant 0 : i32
    %0 = arith.cmpi eq, %arg0, %c0_i32 : i32
    %1 = arith.extui %0 : i1 to i32
    %c0_i32_0 = arith.constant 0 : i32
    %2 = arith.cmpi ne, %1, %c0_i32_0 : i32
    scf.if %2 {
      %cst_23 = arith.constant 0.000000e+00 : f32
      %42 = vector.broadcast %cst_23 : f32 to vector<8x128xf32>
      %c0_24 = arith.constant 0 : index
      %c0_25 = arith.constant 0 : index
      %43 = vector.load %arg15[%c0_24, %c0_25] : memref<8x128xf32, #tpu.memory_space<vmem>>, vector<8x128xf32>
      tpu.vector_store %arg15[%c0_24, %c0_25], %42 {strides = array<i32>} : memref<8x128xf32, #tpu.memory_space<vmem>>, vector<8x128xf32>,
      %c0_26 = arith.constant 0 : index
      %c0_27 = arith.constant 0 : index
      %44 = vector.load %arg1[%c0_26, %c0_27] : memref<8x128xbf16, #tpu.memory_space<vmem>>, vector<8x128xbf16>
      %c0_28 = arith.constant 0 : index
      %c0_29 = arith.constant 0 : index
      %45 = vector.load %arg3[%c0_28, %c0_29] : memref<128x128xbf16, #tpu.memory_space<vmem>>, vector<128x128xbf16>
      %cst_30 = arith.constant dense<0.000000e+00> : vector<8x128xf32>
      %46 = tpu.matmul %44, %45, %cst_30 {dimension_numbers = #tpu.dot_dimension_numbers<[1], [0], [0], [1], [0, 0, 1, 1], [], []>} : vector<8x128xbf16>, vector<128x128xbf16>, vector<8x128xf32> -> vector<8x128xf32>
      %c0_31 = arith.constant 0 : index
      %c0_32 = arith.constant 0 : index
      %47 = vector.load %arg4[%c0_31, %c0_32] : memref<1x128xf32, #tpu.memory_space<vmem>>, vector<1x128xf32>
      %c0_33 = arith.constant 0 : index
      %c0_34 = arith.constant 0 : index
      %48 = vector.load %arg5[%c0_33, %c0_34] : memref<1x128xf32, #tpu.memory_space<vmem>>, vector<1x128xf32>
      %cst_35 = arith.constant dense<0.000000e+00> : vector<128xf32>
      %49 = vector.multi_reduction <add>, %46, %cst_35 [0] : vector<8x128xf32> to vector<128xf32>
      %50 = vector.shape_cast %49 : vector<128xf32> to vector<1x128xf32>
      %cst_36 = arith.constant 8.000000e+00 : f32
      %51 = vector.broadcast %cst_36 : f32 to vector<1x128xf32>
      %52 = arith.divf %50, %51 : vector<1x128xf32>
      %53 = arith.mulf %46, %46 : vector<8x128xf32>
      %cst_37 = arith.constant dense<0.000000e+00> : vector<128xf32>
      %54 = vector.multi_reduction <add>, %53, %cst_37 [0] : vector<8x128xf32> to vector<128xf32>
      %55 = vector.shape_cast %54 : vector<128xf32> to vector<1x128xf32>
      %cst_38 = arith.constant 8.000000e+00 : f32
      %56 = vector.broadcast %cst_38 : f32 to vector<1x128xf32>
      %57 = arith.divf %55, %56 : vector<1x128xf32>
      %58 = arith.mulf %52, %52 : vector<1x128xf32>
      %59 = arith.subf %57, %58 : vector<1x128xf32>
      %cst_39 = arith.constant 0.000000e+00 : f32
      %60 = vector.broadcast %cst_39 : f32 to vector<1x128xf32>
      %61 = arith.maximumf %59, %60 : vector<1x128xf32>
      %cst_40 = arith.constant 9.99999974E-6 : f32
      %62 = vector.broadcast %cst_40 : f32 to vector<1x128xf32>
      %63 = arith.addf %61, %62 : vector<1x128xf32>
      %64 = math.rsqrt %63 : vector<1x128xf32>
      %65 = arith.mulf %47, %64 : vector<1x128xf32>
      %66 = vector.broadcast %65 : vector<1x128xf32> to vector<8x128xf32>
      %67 = arith.mulf %46, %66 : vector<8x128xf32>
      %68 = arith.mulf %52, %65 : vector<1x128xf32>
      %69 = arith.subf %48, %68 : vector<1x128xf32>
      %70 = vector.broadcast %69 : vector<1x128xf32> to vector<8x128xf32>
      %71 = arith.addf %67, %70 : vector<8x128xf32>
      %72 = arith.mulf %71, %71 : vector<8x128xf32>
      %cst_41 = arith.constant dense<0.000000e+00> : vector<8xf32>
      %73 = vector.multi_reduction <add>, %72, %cst_41 [1] : vector<8x128xf32> to vector<8xf32>
      %74 = vector.shape_cast %73 : vector<8xf32> to vector<8x1xf32>
      %cst_42 = arith.constant 1.000000e-24 : f32
      %75 = vector.broadcast %cst_42 : f32 to vector<8x1xf32>
      %76 = arith.addf %74, %75 : vector<8x1xf32>
      %77 = math.rsqrt %76 : vector<8x1xf32>
      %78 = vector.broadcast %77 : vector<8x1xf32> to vector<8x128xf32>
      %79 = arith.mulf %71, %78 : vector<8x128xf32>
      %cst_43 = arith.constant 14.2857141 : f32
      %80 = vector.broadcast %cst_43 : f32 to vector<8x128xf32>
      %81 = arith.mulf %79, %80 : vector<8x128xf32>
      %82 = arith.truncf %81 : vector<8x128xf32> to vector<8x128xbf16>
      %c0_44 = arith.constant 0 : index
      %c0_45 = arith.constant 0 : index
      %83 = vector.load %arg12[%c0_44, %c0_45] : memref<8x128xbf16, #tpu.memory_space<vmem>>, vector<8x128xbf16>
      tpu.vector_store %arg12[%c0_44, %c0_45], %82 {strides = array<i32>} : memref<8x128xbf16, #tpu.memory_space<vmem>>, vector<8x128xbf16>,
    } else {
    }
    %c0 = arith.constant 0 : index
    %c0_1 = arith.constant 0 : index
    %3 = vector.load %arg2[%c0, %c0_1] : memref<8x128xbf16, #tpu.memory_space<vmem>>, vector<8x128xbf16>
    %c0_2 = arith.constant 0 : index
    %c0_3 = arith.constant 0 : index
    %4 = vector.load %arg6[%c0_2, %c0_3] : memref<128x256xbf16, #tpu.memory_space<vmem>>, vector<128x256xbf16>
    %cst = arith.constant dense<0.000000e+00> : vector<8x256xf32>
    %5 = tpu.matmul %3, %4, %cst {dimension_numbers = #tpu.dot_dimension_numbers<[1], [0], [0], [1], [0, 0, 1, 1], [], []>} : vector<8x128xbf16>, vector<128x256xbf16>, vector<8x256xf32> -> vector<8x256xf32>
    %c0_4 = arith.constant 0 : index
    %c0_5 = arith.constant 0 : index
    %6 = vector.load %arg7[%c0_4, %c0_5] : memref<1x256xf32, #tpu.memory_space<vmem>>, vector<1x256xf32>
    %c0_6 = arith.constant 0 : index
    %c0_7 = arith.constant 0 : index
    %7 = vector.load %arg8[%c0_6, %c0_7] : memref<1x256xf32, #tpu.memory_space<vmem>>, vector<1x256xf32>
    %cst_8 = arith.constant dense<0.000000e+00> : vector<256xf32>
    %8 = vector.multi_reduction <add>, %5, %cst_8 [0] : vector<8x256xf32> to vector<256xf32>
    %9 = vector.shape_cast %8 : vector<256xf32> to vector<1x256xf32>
    %cst_9 = arith.constant 8.000000e+00 : f32
    %10 = vector.broadcast %cst_9 : f32 to vector<1x256xf32>
    %11 = arith.divf %9, %10 : vector<1x256xf32>
    %12 = arith.mulf %5, %5 : vector<8x256xf32>
    %cst_10 = arith.constant dense<0.000000e+00> : vector<256xf32>
    %13 = vector.multi_reduction <add>, %12, %cst_10 [0] : vector<8x256xf32> to vector<256xf32>
    %14 = vector.shape_cast %13 : vector<256xf32> to vector<1x256xf32>
    %cst_11 = arith.constant 8.000000e+00 : f32
    %15 = vector.broadcast %cst_11 : f32 to vector<1x256xf32>
    %16 = arith.divf %14, %15 : vector<1x256xf32>
    %17 = arith.mulf %11, %11 : vector<1x256xf32>
    %18 = arith.subf %16, %17 : vector<1x256xf32>
    %cst_12 = arith.constant 0.000000e+00 : f32
    %19 = vector.broadcast %cst_12 : f32 to vector<1x256xf32>
    %20 = arith.maximumf %18, %19 : vector<1x256xf32>
    %cst_13 = arith.constant 9.99999974E-6 : f32
    %21 = vector.broadcast %cst_13 : f32 to vector<1x256xf32>
    %22 = arith.addf %20, %21 : vector<1x256xf32>
    %23 = math.rsqrt %22 : vector<1x256xf32>
    %24 = arith.mulf %6, %23 : vector<1x256xf32>
    %25 = vector.broadcast %24 : vector<1x256xf32> to vector<8x256xf32>
    %26 = arith.mulf %5, %25 : vector<8x256xf32>
    %27 = arith.mulf %11, %24 : vector<1x256xf32>
    %28 = arith.subf %7, %27 : vector<1x256xf32>
    %29 = vector.broadcast %28 : vector<1x256xf32> to vector<8x256xf32>
    %30 = arith.addf %26, %29 : vector<8x256xf32>
    %cst_14 = arith.constant 0.000000e+00 : f32
    %31 = vector.broadcast %cst_14 : f32 to vector<8x256xf32>
    %32 = arith.maximumf %30, %31 : vector<8x256xf32>
    %c0_15 = arith.constant 0 : index
    %c0_16 = arith.constant 0 : index
    %33 = vector.load %arg15[%c0_15, %c0_16] : memref<8x128xf32, #tpu.memory_space<vmem>>, vector<8x128xf32>
    %34 = arith.truncf %32 : vector<8x256xf32> to vector<8x256xbf16>
    %c0_17 = arith.constant 0 : index
    %c0_18 = arith.constant 0 : index
    %35 = vector.load %arg9[%c0_17, %c0_18] : memref<256x128xbf16, #tpu.memory_space<vmem>>, vector<256x128xbf16>
    %cst_19 = arith.constant dense<0.000000e+00> : vector<8x128xf32>
    %36 = tpu.matmul %34, %35, %cst_19 {dimension_numbers = #tpu.dot_dimension_numbers<[1], [0], [0], [1], [0, 0, 1, 1], [], []>} : vector<8x256xbf16>, vector<256x128xbf16>, vector<8x128xf32> -> vector<8x128xf32>
    %37 = arith.addf %33, %36 : vector<8x128xf32>
    %c0_20 = arith.constant 0 : index
    %c0_21 = arith.constant 0 : index
    %38 = vector.load %arg15[%c0_20, %c0_21] : memref<8x128xf32, #tpu.memory_space<vmem>>, vector<8x128xf32>
    tpu.vector_store %arg15[%c0_20, %c0_21], %37 {strides = array<i32>} : memref<8x128xf32, #tpu.memory_space<vmem>>, vector<8x128xf32>,
    %c3_i32 = arith.constant 3 : i32
    %39 = arith.cmpi eq, %arg0, %c3_i32 : i32
    %40 = arith.extui %39 : i1 to i32
    %c0_i32_22 = arith.constant 0 : i32
    %41 = arith.cmpi ne, %40, %c0_i32_22 : i32
    scf.if %41 {
      %c0_23 = arith.constant 0 : index
      %c0_24 = arith.constant 0 : index
      %42 = vector.load %arg15[%c0_23, %c0_24] : memref<8x128xf32, #tpu.memory_space<vmem>>, vector<8x128xf32>
      %c0_25 = arith.constant 0 : index
      %c0_26 = arith.constant 0 : index
      %43 = vector.load %arg10[%c0_25, %c0_26] : memref<1x128xf32, #tpu.memory_space<vmem>>, vector<1x128xf32>
      %c0_27 = arith.constant 0 : index
      %c0_28 = arith.constant 0 : index
      %44 = vector.load %arg11[%c0_27, %c0_28] : memref<1x128xf32, #tpu.memory_space<vmem>>, vector<1x128xf32>
      %cst_29 = arith.constant dense<0.000000e+00> : vector<128xf32>
      %45 = vector.multi_reduction <add>, %42, %cst_29 [0] : vector<8x128xf32> to vector<128xf32>
      %46 = vector.shape_cast %45 : vector<128xf32> to vector<1x128xf32>
      %cst_30 = arith.constant 8.000000e+00 : f32
      %47 = vector.broadcast %cst_30 : f32 to vector<1x128xf32>
      %48 = arith.divf %46, %47 : vector<1x128xf32>
      %49 = arith.mulf %42, %42 : vector<8x128xf32>
      %cst_31 = arith.constant dense<0.000000e+00> : vector<128xf32>
      %50 = vector.multi_reduction <add>, %49, %cst_31 [0] : vector<8x128xf32> to vector<128xf32>
      %51 = vector.shape_cast %50 : vector<128xf32> to vector<1x128xf32>
      %cst_32 = arith.constant 8.000000e+00 : f32
      %52 = vector.broadcast %cst_32 : f32 to vector<1x128xf32>
      %53 = arith.divf %51, %52 : vector<1x128xf32>
      %54 = arith.mulf %48, %48 : vector<1x128xf32>
      %55 = arith.subf %53, %54 : vector<1x128xf32>
      %cst_33 = arith.constant 0.000000e+00 : f32
      %56 = vector.broadcast %cst_33 : f32 to vector<1x128xf32>
      %57 = arith.maximumf %55, %56 : vector<1x128xf32>
      %cst_34 = arith.constant 9.99999974E-6 : f32
      %58 = vector.broadcast %cst_34 : f32 to vector<1x128xf32>
      %59 = arith.addf %57, %58 : vector<1x128xf32>
      %60 = math.rsqrt %59 : vector<1x128xf32>
      %61 = arith.mulf %43, %60 : vector<1x128xf32>
      %62 = vector.broadcast %61 : vector<1x128xf32> to vector<8x128xf32>
      %63 = arith.mulf %42, %62 : vector<8x128xf32>
      %64 = arith.mulf %48, %61 : vector<1x128xf32>
      %65 = arith.subf %44, %64 : vector<1x128xf32>
      %66 = vector.broadcast %65 : vector<1x128xf32> to vector<8x128xf32>
      %67 = arith.addf %63, %66 : vector<8x128xf32>
      %68 = arith.mulf %67, %67 : vector<8x128xf32>
      %cst_35 = arith.constant dense<0.000000e+00> : vector<8xf32>
      %69 = vector.multi_reduction <add>, %68, %cst_35 [1] : vector<8x128xf32> to vector<8xf32>
      %70 = vector.shape_cast %69 : vector<8xf32> to vector<8x1xf32>
      %cst_36 = arith.constant 1.000000e-24 : f32
      %71 = vector.broadcast %cst_36 : f32 to vector<8x1xf32>
      %72 = arith.addf %70, %71 : vector<8x1xf32>
      %73 = math.rsqrt %72 : vector<8x1xf32>
      %74 = vector.broadcast %73 : vector<8x1xf32> to vector<8x128xf32>
      %75 = arith.mulf %67, %74 : vector<8x128xf32>
      %76 = arith.truncf %75 : vector<8x128xf32> to vector<8x128xbf16>
      %c0_37 = arith.constant 0 : index
      %c0_38 = arith.constant 0 : index
      %77 = vector.load %arg13[%c0_37, %c0_38] : memref<8x128xbf16, #tpu.memory_space<vmem>>, vector<8x128xbf16>
      tpu.vector_store %arg13[%c0_37, %c0_38], %76 {strides = array<i32>} : memref<8x128xbf16, #tpu.memory_space<vmem>>, vector<8x128xbf16>,
      %c0_39 = arith.constant 0 : index
      %c0_40 = arith.constant 0 : index
      %78 = vector.load %arg12[%c0_39, %c0_40] : memref<8x128xbf16, #tpu.memory_space<vmem>>, vector<8x128xbf16>
      %79 = arith.extf %78 : vector<8x128xbf16> to vector<8x128xf32>
      %80 = arith.extf %76 : vector<8x128xbf16> to vector<8x128xf32>
      %c4_i32 = arith.constant 4 : i32
      %81 = tpu.dynamic_rotate %80 by %c4_i32 dim 0 : vector<8x128xf32>, i32 -> vector<8x128xf32>
      %82 = arith.mulf %79, %81 : vector<8x128xf32>
      %cst_41 = arith.constant dense<0.000000e+00> : vector<8xf32>
      %83 = vector.multi_reduction <add>, %82, %cst_41 [1] : vector<8x128xf32> to vector<8xf32>
      %84 = vector.shape_cast %83 : vector<8xf32> to vector<8x1xf32>
      %c0_42 = arith.constant 0 : index
      %c0_43 = arith.constant 0 : index
      %85 = vector.load %arg14[%c0_42, %c0_43] : memref<8x1xf32, #tpu.memory_space<vmem>>, vector<8x1xf32>
      tpu.vector_store %arg14[%c0_42, %c0_43], %84 {strides = array<i32>} : memref<8x1xf32, #tpu.memory_space<vmem>>, vector<8x1xf32>,
    } else {
    }
    return
  }
  func.func @transform_0(%arg0: i32) -> (i32, i32) {
    %c0_i32 = arith.constant 0 : i32
    %c0_i32_0 = arith.constant 0 : i32
    %c0_i32_1 = arith.constant 0 : i32
    return %c0_i32, %c0_i32_0 : i32, i32
  }
  func.func @transform_1(%arg0: i32) -> (i32, i32) {
    %c0_i32 = arith.constant 0 : i32
    %c0_i32_0 = arith.constant 0 : i32
    %c0_i32_1 = arith.constant 0 : i32
    return %c0_i32, %c0_i32_0 : i32, i32
  }
  func.func @transform_2(%arg0: i32) -> (i32, i32) {
    %c0_i32 = arith.constant 0 : i32
    %c0_i32_0 = arith.constant 0 : i32
    %c0_i32_1 = arith.constant 0 : i32
    return %c0_i32, %c0_i32_0 : i32, i32
  }
  func.func @transform_3(%arg0: i32) -> (i32, i32) {
    %c0_i32 = arith.constant 0 : i32
    %c0_i32_0 = arith.constant 0 : i32
    %c0_i32_1 = arith.constant 0 : i32
    return %c0_i32, %c0_i32_0 : i32, i32
  }
  func.func @transform_4(%arg0: i32) -> (i32, i32) {
    %c0_i32 = arith.constant 0 : i32
    %c0_i32_0 = arith.constant 0 : i32
    %c0_i32_1 = arith.constant 0 : i32
    return %c0_i32, %c0_i32_0 : i32, i32
  }
  func.func @transform_5(%arg0: i32) -> (i32, i32) {
    %c0_i32 = arith.constant 0 : i32
    %c0_i32_0 = arith.constant 0 : i32
    return %c0_i32, %arg0 : i32, i32
  }
  func.func @transform_6(%arg0: i32) -> (i32, i32) {
    %c0_i32 = arith.constant 0 : i32
    %c0_i32_0 = arith.constant 0 : i32
    return %c0_i32, %arg0 : i32, i32
  }
  func.func @transform_7(%arg0: i32) -> (i32, i32) {
    %c0_i32 = arith.constant 0 : i32
    %c0_i32_0 = arith.constant 0 : i32
    return %c0_i32, %arg0 : i32, i32
  }
  func.func @transform_8(%arg0: i32) -> (i32, i32) {
    %c0_i32 = arith.constant 0 : i32
    %c0_i32_0 = arith.constant 0 : i32
    return %arg0, %c0_i32 : i32, i32
  }
  func.func @transform_9(%arg0: i32) -> (i32, i32) {
    %c0_i32 = arith.constant 0 : i32
    %c0_i32_0 = arith.constant 0 : i32
    %c0_i32_1 = arith.constant 0 : i32
    return %c0_i32, %c0_i32_0 : i32, i32
  }
  func.func @transform_10(%arg0: i32) -> (i32, i32) {
    %c0_i32 = arith.constant 0 : i32
    %c0_i32_0 = arith.constant 0 : i32
    %c0_i32_1 = arith.constant 0 : i32
    return %c0_i32, %c0_i32_0 : i32, i32
  }
  func.func @transform_11(%arg0: i32) -> (i32, i32) {
    %c0_i32 = arith.constant 0 : i32
    %c0_i32_0 = arith.constant 0 : i32
    %c0_i32_1 = arith.constant 0 : i32
    return %c0_i32, %c0_i32_0 : i32, i32
  }
  func.func @transform_12(%arg0: i32) -> (i32, i32) {
    %c0_i32 = arith.constant 0 : i32
    %c0_i32_0 = arith.constant 0 : i32
    %c0_i32_1 = arith.constant 0 : i32
    return %c0_i32, %c0_i32_0 : i32, i32
  }
  func.func @transform_13(%arg0: i32) -> (i32, i32) {
    %c0_i32 = arith.constant 0 : i32
    %c0_i32_0 = arith.constant 0 : i32
    %c0_i32_1 = arith.constant 0 : i32
    return %c0_i32, %c0_i32_0 : i32, i32
  }
}

</mosaic_0001>

<llo_original>
// kernel: tpu_custom_call.1
$region0: #{tpu_custom_call.1}
  #allocation0 [shape = 'u32[]', space=smem, size = 0x4, offset = 0x4, fixed_abs, tag = 'smem constant byte address 0x4 - core index']
  #allocation1 [shape = 'u32[144,128]{1,0:T(1,128)}', space=vmem, size = 0x12000, scoped, tag = 'internal scratch']
  #allocation2 [shape = 'f32[8,128]{1,0:T(8,128)}', space=vmem, size = 0x1000, scoped, tag = 'scratch operand']
  %s0 = inlined_call_operand.hbm [shape: bf16[8,128], index: 0, kind: input, shape index: {}]
  %s1 = inlined_call_operand.hbm [shape: bf16[8,128], index: 1, kind: input, shape index: {}]
  %s2 = inlined_call_operand.hbm [shape: bf16[128,128], index: 2, kind: input, shape index: {}]
  %s3 = inlined_call_operand.vmem [shape: f32[1,128], index: 3, kind: input, shape index: {}]
  %s4 = inlined_call_operand.vmem [shape: f32[1,128], index: 4, kind: input, shape index: {}]
  %s5 = inlined_call_operand.hbm [shape: bf16[128,1024], index: 5, kind: input, shape index: {}]
  %s6 = inlined_call_operand.vmem [shape: f32[1,1024], index: 6, kind: input, shape index: {}]
  %s7 = inlined_call_operand.hbm [shape: f32[1,1024], index: 7, kind: input, shape index: {}]
  %s8 = inlined_call_operand.hbm [shape: bf16[1024,128], index: 8, kind: input, shape index: {}]
  %s9 = inlined_call_operand.vmem [shape: f32[1,128], index: 9, kind: input, shape index: {}]
  %s10 = inlined_call_operand.vmem [shape: f32[1,128], index: 10, kind: input, shape index: {}]
  %s11 = inlined_call_operand.hbm [shape: bf16[8,128], index: 11, kind: output, shape index: {0}]
  %s12 = inlined_call_operand.hbm [shape: bf16[8,128], index: 12, kind: output, shape index: {1}]
  %s13 = inlined_call_operand.vmem [shape: f32[8,1], index: 13, kind: output, shape index: {2}]
  %14 = xla_tuple %s11, %s12, %s13
  %s15 = sld [smem:[#allocation0]]
  $region125: #{tpu_custom_call.1} parent=0
    _
  %s17 = ssub.s32 1, %s15
  %s18 = scalar_select 0, %s17, %s15
  $region1: #{tpu_custom_call.1} parent=0
    #allocation3 [shape = 'u8[2048]{0}', space=vmem, size = 0x800, scoped, tag = 'input window, operand 0, single buffered']
    #allocation4 [shape = 's32[2]{0}', space=sflag, size = 0x8, scoped, tag = 'scoped memory for tpu_custom_call.1']
    #allocation5 [shape = 's32[2]{0}', space=sflag, size = 0x8, scoped, tag = 'scoped memory for tpu_custom_call.1']
    #allocation6 [shape = 'u8[2048]{0}', space=vmem, size = 0x800, scoped, tag = 'input window, operand 1, single buffered']
    #allocation7 [shape = 's32[1]{0}', space=sflag, size = 0x4, scoped, tag = 'scoped memory for tpu_custom_call.1']
    #allocation8 [shape = 'u8[32768]{0}', space=vmem, size = 0x8000, scoped, tag = 'input window, operand 2, single buffered']
    #allocation9 [shape = 'u8[131072]{0}', space=vmem, size = 0x20000, scoped, tag = 'input window, operand 5']
    #allocation10 [shape = 's32[2]{0}', space=sflag, size = 0x8, scoped, tag = 'scoped memory for tpu_custom_call.1']
    #allocation11 [shape = 'u8[2048]{0}', space=vmem, size = 0x800, scoped, tag = 'input window, operand 7']
    #allocation12 [shape = 'u8[131072]{0}', space=vmem, size = 0x20000, scoped, tag = 'input window, operand 8']
    #allocation13 [shape = 's32[2]{0}', space=sflag, size = 0x8, scoped, tag = 'scoped memory for tpu_custom_call.1']
    #allocation14 [shape = 'u8[2048]{0}', space=vmem, size = 0x800, scoped, tag = 'output window, operand 0, single buffered']
    #allocation15 [shape = 'u8[2048]{0}', space=vmem, size = 0x800, scoped, tag = 'output window, operand 1, single buffered']
    #allocation16 [shape = 's32[1]{0}', space=sflag, size = 0x4, scoped, tag = 'scoped memory for tpu_custom_call.1']
    %19 = vsyncpa [#allocation4], 0
    %20 = vsyncpa [#allocation7], 0
    %21 = vsyncpa [#allocation10], 0
    %s22 = scalar_lea.sflag [#allocation10], 1
    %23 = vsyncpa %s22, 0
    %24 = vsyncpa [#allocation13], 0
    %s25 = scalar_lea.sflag [#allocation13], 1
    %26 = vsyncpa %s25, 0
    %27 = vsyncpa [#allocation5], 0
    %28 = vsyncpa [#allocation16], 0
    loop: start=0, step=1, limit=6
    $region2: #{tpu_custom_call.1} parent=1 // loop_pre_header
      _
    $region3: #{tpu_custom_call.1} parent=1 // loop_header
      %s30 = sphi 0, %s34
      %p31 = scmp.ge.s32.totalorder %s30, 6
      %s38 = sphi 0, %s38
      %s40 = sphi 0, %s38
      %s41 = sphi 0, %s40
      %s55 = sphi 0, %s41
      %s59 = sphi 0, %s59
      %s61 = sphi 0, %s59
      %s62 = sphi 0, %s61
      %s76 = sphi 0, %s62
      %s80 = sphi 0, %s80
      %s82 = sphi 0, %s80
      %s83 = sphi 0, %s82
      %s97 = sphi 0, %s83
      %s101 = sphi 0, %s101
      %s103 = sphi 0, %s101
      %s104 = sphi 0, %s103
      %s118 = sphi 0, %s104
      %s122 = sphi 0, %s122
      %s124 = sphi 0, %s122
      %s125 = sphi 0, %s124
      %s139 = sphi 0, %s125
      %s145 = sphi 0, %s147
      %s148 = sphi 0, %s145
      %s149 = sphi 0, %s148
      %s165 = sphi 0, %s149
      %s171 = sphi 0, %s173
      %s174 = sphi 0, %s171
      %s175 = sphi 0, %s174
      %s191 = sphi 0, %s175
      %s197 = sphi 0, %s199
      %s200 = sphi 0, %s197
      %s201 = sphi 0, %s200
      %s217 = sphi 0, %s201
      %s223 = sphi 0, %s225
      %s226 = sphi 0, %s223
      %s227 = sphi 0, %s226
      %s243 = sphi 0, %s227
      %s247 = sphi 0, %s247
      %s249 = sphi 0, %s247
      %s250 = sphi 0, %s249
      %s264 = sphi 0, %s250
      %s268 = sphi 0, %s268
      %s270 = sphi 0, %s268
      %s271 = sphi 0, %s270
      %s285 = sphi 0, %s271
      %s289 = sphi 0, %s289
      %s291 = sphi 0, %s289
      %s292 = sphi 0, %s291
      %s306 = sphi 0, %s292
      %s310 = sphi 0, %s310
      %s312 = sphi 0, %s310
      %s313 = sphi 0, %s312
      %s327 = sphi 0, %s313
      %s331 = sphi 0, %s331
      %s333 = sphi 0, %s331
      %s334 = sphi 0, %s333
      %s348 = sphi 0, %s334
    $region4: #{tpu_custom_call.1} parent=1 // loop_header_branch
      %33 = sbr.rel (%p31) target = $region8
    $region5: #{tpu_custom_call.1} parent=1 // loop_body
      %s35 = ssub.s32 %s30, 1
      %s36 = ssub.s32 %s30, 2
      %s37 = sadd.s32 %s30, 1
      %s39 = sadd.s32 %s38, 1
      %p42 = scmp.eq.s32.totalorder %s30, 3
      %p43 = scmp.ne.s32.totalorder %s38, %s40
      %p44 = scmp.eq.s32.totalorder %s30, 0
      %p45 = por %p43, %p44
      %p46 = scmp.ne.s32.totalorder %s38, %s40
      %p47 = scmp.eq.s32.totalorder %s35, 3
      %p48 = por %p46, %p47
      %p49 = scmp.ne.s32.totalorder %s40, %s41
      %p50 = scmp.eq.s32.totalorder %s35, 0
      %p51 = por %p49, %p50
      %p52 = scmp.ne.s32.totalorder %s40, %s41
      %p53 = scmp.eq.s32.totalorder %s36, 3
      %p54 = por %p52, %p53
      %p56 = scmp.ne.s32.totalorder %s41, %s55
      %p57 = scmp.eq.s32.totalorder %s36, 0
      %p58 = por %p56, %p57
      %s60 = sadd.s32 %s59, 1
      %p63 = scmp.eq.s32.totalorder %s30, 3
      %p64 = scmp.ne.s32.totalorder %s59, %s61
      %p65 = scmp.eq.s32.totalorder %s30, 0
      %p66 = por %p64, %p65
      %p67 = scmp.ne.s32.totalorder %s59, %s61
      %p68 = scmp.eq.s32.totalorder %s35, 3
      %p69 = por %p67, %p68
      %p70 = scmp.ne.s32.totalorder %s61, %s62
      %p71 = scmp.eq.s32.totalorder %s35, 0
      %p72 = por %p70, %p71
      %p73 = scmp.ne.s32.totalorder %s61, %s62
      %p74 = scmp.eq.s32.totalorder %s36, 3
      %p75 = por %p73, %p74
      %p77 = scmp.ne.s32.totalorder %s62, %s76
      %p78 = scmp.eq.s32.totalorder %s36, 0
      %p79 = por %p77, %p78
      %s81 = sadd.s32 %s80, 1
      %p84 = scmp.eq.s32.totalorder %s30, 3
      %p85 = scmp.ne.s32.totalorder %s80, %s82
      %p86 = scmp.eq.s32.totalorder %s30, 0
      %p87 = por %p85, %p86
      %p88 = scmp.ne.s32.totalorder %s80, %s82
      %p89 = scmp.eq.s32.totalorder %s35, 3
      %p90 = por %p88, %p89
      %p91 = scmp.ne.s32.totalorder %s82, %s83
      %p92 = scmp.eq.s32.totalorder %s35, 0
      %p93 = por %p91, %p92
      %p94 = scmp.ne.s32.totalorder %s82, %s83
      %p95 = scmp.eq.s32.totalorder %s36, 3
      %p96 = por %p94, %p95
      %p98 = scmp.ne.s32.totalorder %s83, %s97
      %p99 = scmp.eq.s32.totalorder %s36, 0
      %p100 = por %p98, %p99
      %s102 = sadd.s32 %s101, 1
      %p105 = scmp.eq.s32.totalorder %s30, 3
      %p106 = scmp.ne.s32.totalorder %s101, %s103
      %p107 = scmp.eq.s32.totalorder %s30, 0
      %p108 = por %p106, %p107
      %p109 = scmp.ne.s32.totalorder %s101, %s103
      %p110 = scmp.eq.s32.totalorder %s35, 3
      %p111 = por %p109, %p110
      %p112 = scmp.ne.s32.totalorder %s103, %s104
      %p113 = scmp.eq.s32.totalorder %s35, 0
      %p114 = por %p112, %p113
      %p115 = scmp.ne.s32.totalorder %s103, %s104
      %p116 = scmp.eq.s32.totalorder %s36, 3
      %p117 = por %p115, %p116
      %p119 = scmp.ne.s32.totalorder %s104, %s118
      %p120 = scmp.eq.s32.totalorder %s36, 0
      %p121 = por %p119, %p120
      %s123 = sadd.s32 %s122, 1
      %p126 = scmp.eq.s32.totalorder %s30, 3
      %p127 = scmp.ne.s32.totalorder %s122, %s124
      %p128 = scmp.eq.s32.totalorder %s30, 0
      %p129 = por %p127, %p128
      %p130 = scmp.ne.s32.totalorder %s122, %s124
      %p131 = scmp.eq.s32.totalorder %s35, 3
      %p132 = por %p130, %p131
      %p133 = scmp.ne.s32.totalorder %s124, %s125
      %p134 = scmp.eq.s32.totalorder %s35, 0
      %p135 = por %p133, %p134
      %p136 = scmp.ne.s32.totalorder %s124, %s125
      %p137 = scmp.eq.s32.totalorder %s36, 3
      %p138 = por %p136, %p137
      %p140 = scmp.ne.s32.totalorder %s125, %s139
      %p141 = scmp.eq.s32.totalorder %s36, 0
      %p142 = por %p140, %p141
      %s143 = ssub.s32 %s30, %s37
      %p144 = scmp.eq.s32.totalorder %s143, 0
      %s146 = sadd.s32 %s145, 1
      %s147 = scalar_select %p144, %s145, %s146
      %p150 = pneg %p144
      %p151 = scmp.eq.s32.totalorder %s30, 3
      %p152 = por %p150, %p151
      %p153 = scmp.ne.s32.totalorder %s145, %s148
      %p154 = scmp.eq.s32.totalorder %s30, 0
      %p155 = por %p153, %p154
      %p156 = scmp.ne.s32.totalorder %s145, %s148
      %p157 = scmp.eq.s32.totalorder %s35, 3
      %p158 = por %p156, %p157
      %p159 = scmp.ne.s32.totalorder %s148, %s149
      %p160 = scmp.eq.s32.totalorder %s35, 0
      %p161 = por %p159, %p160
      %p162 = scmp.ne.s32.totalorder %s148, %s149
      %p163 = scmp.eq.s32.totalorder %s36, 3
      %p164 = por %p162, %p163
      %p166 = scmp.ne.s32.totalorder %s149, %s165
      %p167 = scmp.eq.s32.totalorder %s36, 0
      %p168 = por %p166, %p167
      %s169 = ssub.s32 %s30, %s37
      %p170 = scmp.eq.s32.totalorder %s169, 0
      %s172 = sadd.s32 %s171, 1
      %s173 = scalar_select %p170, %s171, %s172
      %p176 = pneg %p170
      %p177 = scmp.eq.s32.totalorder %s30, 3
      %p178 = por %p176, %p177
      %p179 = scmp.ne.s32.totalorder %s171, %s174
      %p180 = scmp.eq.s32.totalorder %s30, 0
      %p181 = por %p179, %p180
      %p182 = scmp.ne.s32.totalorder %s171, %s174
      %p183 = scmp.eq.s32.totalorder %s35, 3
      %p184 = por %p182, %p183
      %p185 = scmp.ne.s32.totalorder %s174, %s175
      %p186 = scmp.eq.s32.totalorder %s35, 0
      %p187 = por %p185, %p186
      %p188 = scmp.ne.s32.totalorder %s174, %s175
      %p189 = scmp.eq.s32.totalorder %s36, 3
      %p190 = por %p188, %p189
      %p192 = scmp.ne.s32.totalorder %s175, %s191
      %p193 = scmp.eq.s32.totalorder %s36, 0
      %p194 = por %p192, %p193
      %s195 = ssub.s32 %s30, %s37
      %p196 = scmp.eq.s32.totalorder %s195, 0
      %s198 = sadd.s32 %s197, 1
      %s199 = scalar_select %p196, %s197, %s198
      %p202 = pneg %p196
      %p203 = scmp.eq.s32.totalorder %s30, 3
      %p204 = por %p202, %p203
      %p205 = scmp.ne.s32.totalorder %s197, %s200
      %p206 = scmp.eq.s32.totalorder %s30, 0
      %p207 = por %p205, %p206
      %p208 = scmp.ne.s32.totalorder %s197, %s200
      %p209 = scmp.eq.s32.totalorder %s35, 3
      %p210 = por %p208, %p209
      %p211 = scmp.ne.s32.totalorder %s200, %s201
      %p212 = scmp.eq.s32.totalorder %s35, 0
      %p213 = por %p211, %p212
      %p214 = scmp.ne.s32.totalorder %s200, %s201
      %p215 = scmp.eq.s32.totalorder %s36, 3
      %p216 = por %p214, %p215
      %p218 = scmp.ne.s32.totalorder %s201, %s217
      %p219 = scmp.eq.s32.totalorder %s36, 0
      %p220 = por %p218, %p219
      %s221 = ssub.s32 %s30, %s37
      %p222 = scmp.eq.s32.totalorder %s221, 0
      %s224 = sadd.s32 %s223, 1
      %s225 = scalar_select %p222, %s223, %s224
      %p228 = pneg %p222
      %p229 = scmp.eq.s32.totalorder %s30, 3
      %p230 = por %p228, %p229
      %p231 = scmp.ne.s32.totalorder %s223, %s226
      %p232 = scmp.eq.s32.totalorder %s30, 0
      %p233 = por %p231, %p232
      %p234 = scmp.ne.s32.totalorder %s223, %s226
      %p235 = scmp.eq.s32.totalorder %s35, 3
      %p236 = por %p234, %p235
      %p237 = scmp.ne.s32.totalorder %s226, %s227
      %p238 = scmp.eq.s32.totalorder %s35, 0
      %p239 = por %p237, %p238
      %p240 = scmp.ne.s32.totalorder %s226, %s227
      %p241 = scmp.eq.s32.totalorder %s36, 3
      %p242 = por %p240, %p241
      %p244 = scmp.ne.s32.totalorder %s227, %s243
      %p245 = scmp.eq.s32.totalorder %s36, 0
      %p246 = por %p244, %p245
      %s248 = sadd.s32 %s247, 1
      %p251 = scmp.eq.s32.totalorder %s30, 3
      %p252 = scmp.ne.s32.totalorder %s247, %s249
      %p253 = scmp.eq.s32.totalorder %s30, 0
      %p254 = por %p252, %p253
      %p255 = scmp.ne.s32.totalorder %s247, %s249
      %p256 = scmp.eq.s32.totalorder %s35, 3
      %p257 = por %p255, %p256
      %p258 = scmp.ne.s32.totalorder %s249, %s250
      %p259 = scmp.eq.s32.totalorder %s35, 0
      %p260 = por %p258, %p259
      %p261 = scmp.ne.s32.totalorder %s249, %s250
      %p262 = scmp.eq.s32.totalorder %s36, 3
      %p263 = por %p261, %p262
      %p265 = scmp.ne.s32.totalorder %s250, %s264
      %p266 = scmp.eq.s32.totalorder %s36, 0
      %p267 = por %p265, %p266
      %s269 = sadd.s32 %s268, 1
      %p272 = scmp.eq.s32.totalorder %s30, 3
      %p273 = scmp.ne.s32.totalorder %s268, %s270
      %p274 = scmp.eq.s32.totalorder %s30, 0
      %p275 = por %p273, %p274
      %p276 = scmp.ne.s32.totalorder %s268, %s270
      %p277 = scmp.eq.s32.totalorder %s35, 3
      %p278 = por %p276, %p277
      %p279 = scmp.ne.s32.totalorder %s270, %s271
      %p280 = scmp.eq.s32.totalorder %s35, 0
      %p281 = por %p279, %p280
      %p282 = scmp.ne.s32.totalorder %s270, %s271
      %p283 = scmp.eq.s32.totalorder %s36, 3
      %p284 = por %p282, %p283
      %p286 = scmp.ne.s32.totalorder %s271, %s285
      %p287 = scmp.eq.s32.totalorder %s36, 0
      %p288 = por %p286, %p287
      %s290 = sadd.s32 %s289, 1
      %p293 = scmp.eq.s32.totalorder %s30, 3
      %p294 = scmp.ne.s32.totalorder %s289, %s291
      %p295 = scmp.eq.s32.totalorder %s30, 0
      %p296 = por %p294, %p295
      %p297 = scmp.ne.s32.totalorder %s289, %s291
      %p298 = scmp.eq.s32.totalorder %s35, 3
      %p299 = por %p297, %p298
      %p300 = scmp.ne.s32.totalorder %s291, %s292
      %p301 = scmp.eq.s32.totalorder %s35, 0
      %p302 = por %p300, %p301
      %p303 = scmp.ne.s32.totalorder %s291, %s292
      %p304 = scmp.eq.s32.totalorder %s36, 3
      %p305 = por %p303, %p304
      %p307 = scmp.ne.s32.totalorder %s292, %s306
      %p308 = scmp.eq.s32.totalorder %s36, 0
      %p309 = por %p307, %p308
      %s311 = sadd.s32 %s310, 1
      %p314 = scmp.eq.s32.totalorder %s30, 3
      %p315 = scmp.ne.s32.totalorder %s310, %s312
      %p316 = scmp.eq.s32.totalorder %s30, 0
      %p317 = por %p315, %p316
      %p318 = scmp.ne.s32.totalorder %s310, %s312
      %p319 = scmp.eq.s32.totalorder %s35, 3
      %p320 = por %p318, %p319
      %p321 = scmp.ne.s32.totalorder %s312, %s313
      %p322 = scmp.eq.s32.totalorder %s35, 0
      %p323 = por %p321, %p322
      %p324 = scmp.ne.s32.totalorder %s312, %s313
      %p325 = scmp.eq.s32.totalorder %s36, 3
      %p326 = por %p324, %p325
      %p328 = scmp.ne.s32.totalorder %s313, %s327
      %p329 = scmp.eq.s32.totalorder %s36, 0
      %p330 = por %p328, %p329
      %s332 = sadd.s32 %s331, 1
      %p335 = scmp.eq.s32.totalorder %s30, 3
      %p336 = scmp.ne.s32.totalorder %s331, %s333
      %p337 = scmp.eq.s32.totalorder %s30, 0
      %p338 = por %p336, %p337
      %p339 = scmp.ne.s32.totalorder %s331, %s333
      %p340 = scmp.eq.s32.totalorder %s35, 3
      %p341 = por %p339, %p340
      %p342 = scmp.ne.s32.totalorder %s333, %s334
      %p343 = scmp.eq.s32.totalorder %s35, 0
      %p344 = por %p342, %p343
      %p345 = scmp.ne.s32.totalorder %s333, %s334
      %p346 = scmp.eq.s32.totalorder %s36, 3
      %p347 = por %p345, %p346
      %p349 = scmp.ne.s32.totalorder %s334, %s348
      %p350 = scmp.eq.s32.totalorder %s36, 0
      %p351 = por %p349, %p350
      %p352 = scmp.le.s32.totalorder 1, %s30
      %p353 = scmp.lt.s32.totalorder %s30, 5
      %p354 = pnand %p352, %p353
      %p355 = pneg %p354
      // Predicated region
      $region9: #{tpu_custom_call.1} parent=5 // pred_check
        _
      $region10: #{tpu_custom_call.1} parent=5 // pred_check_branch
        %357 = sbr.rel (%p354) target = $region12
      $region11: #{tpu_custom_call.1} parent=5 // pred_region
        %s358 = ssub.s32 %s30, 1
        // Predicated region
        $region13: #{tpu_custom_call.1} parent=11 // pred_check
          %p359 = pneg %p51
        $region14: #{tpu_custom_call.1} parent=11 // pred_check_branch
          %361 = sbr.rel (%p359) target = $region16
        $region15: #{tpu_custom_call.1} parent=11 // pred_region
          %s363 = ssub.s32 64, 64
          %364 = vsyncadd [#allocation4], %s363
          %s366 = sshll.u32 [#allocation3], 4
          %s367 = int_to_ptr.vmem [resolvable:$true] %s366
          %369 = dma.hbm_to_vmem [thread:$0]  %s0, 64, %s367, [#allocation4]
        $region16: #{tpu_custom_call.1} parent=11 // pred_fallthru
          _
        // Predicated region
        $region17: #{tpu_custom_call.1} parent=11 // pred_check
          %p370 = pneg %p72
        $region18: #{tpu_custom_call.1} parent=11 // pred_check_branch
          %372 = sbr.rel (%p370) target = $region20
        $region19: #{tpu_custom_call.1} parent=11 // pred_region
          %s374 = ssub.s32 64, 64
          %375 = vsyncadd [#allocation7], %s374
          %s377 = sshll.u32 [#allocation6], 4
          %s378 = int_to_ptr.vmem [resolvable:$true] %s377
          %380 = dma.hbm_to_vmem [thread:$0]  %s1, 64, %s378, [#allocation7]
        $region20: #{tpu_custom_call.1} parent=11 // pred_fallthru
          _
        // Predicated region
        $region21: #{tpu_custom_call.1} parent=11 // pred_check
          %p381 = pneg %p93
        $region22: #{tpu_custom_call.1} parent=11 // pred_check_branch
          %383 = sbr.rel (%p381) target = $region24
        $region23: #{tpu_custom_call.1} parent=11 // pred_region
          %s385 = ssub.s32 1024, 1024
          %386 = vsyncadd [#allocation7], %s385
          %s387 = sshll.u32 [#allocation8], 4
          %s388 = int_to_ptr.vmem [resolvable:$true] %s387
          %393 = dma.hbm_to_vmem [thread:$0]  %s2, 1024, %s388, [#allocation7], 64, 64, 4
        $region24: #{tpu_custom_call.1} parent=11 // pred_fallthru
          _
        // Predicated region
        $region25: #{tpu_custom_call.1} parent=11 // pred_check
          %p394 = pneg %p114
        $region26: #{tpu_custom_call.1} parent=11 // pred_check_branch
          %396 = sbr.rel (%p394) target = $region28
        $region27: #{tpu_custom_call.1} parent=11 // pred_region
          _
        $region28: #{tpu_custom_call.1} parent=11 // pred_fallthru
          _
        // Predicated region
        $region29: #{tpu_custom_call.1} parent=11 // pred_check
          %p397 = pneg %p135
        $region30: #{tpu_custom_call.1} parent=11 // pred_check_branch
          %399 = sbr.rel (%p397) target = $region32
        $region31: #{tpu_custom_call.1} parent=11 // pred_region
          _
        $region32: #{tpu_custom_call.1} parent=11 // pred_fallthru
          _
        // Predicated region
        $region33: #{tpu_custom_call.1} parent=11 // pred_check
          %p400 = pneg %p260
        $region34: #{tpu_custom_call.1} parent=11 // pred_check_branch
          %402 = sbr.rel (%p400) target = $region36
        $region35: #{tpu_custom_call.1} parent=11 // pred_region
          _
        $region36: #{tpu_custom_call.1} parent=11 // pred_fallthru
          _
        // Predicated region
        $region37: #{tpu_custom_call.1} parent=11 // pred_check
          %p403 = pneg %p281
        $region38: #{tpu_custom_call.1} parent=11 // pred_check_branch
          %405 = sbr.rel (%p403) target = $region40
        $region39: #{tpu_custom_call.1} parent=11 // pred_region
          _
        $region40: #{tpu_custom_call.1} parent=11 // pred_fallthru
          _
      $region12: #{tpu_custom_call.1} parent=5 // pred_fallthru
        _
      %p406 = scmp.lt.s32.totalorder %s30, 4
      // Predicated region
      $region41: #{tpu_custom_call.1} parent=5 // pred_check
        %p407 = pneg %p406
      $region42: #{tpu_custom_call.1} parent=5 // pred_check_branch
        %409 = sbr.rel (%p407) target = $region44
      $region43: #{tpu_custom_call.1} parent=5 // pred_region
        // Predicated region
        $region45: #{tpu_custom_call.1} parent=43 // pred_check
          %p410 = pneg %p155
        $region46: #{tpu_custom_call.1} parent=43 // pred_check_branch
          %412 = sbr.rel (%p410) target = $region48
        $region47: #{tpu_custom_call.1} parent=43 // pred_region
          %s413 = sand.u32 %s30, 1
          %s414 = scalar_lea.sflag [#allocation10], %s413
          %s415 = sand.u32 %s145, 1
          %s416 = smul.addr %s415, 128
          %s417 = scalar_lea.vmem [#allocation9], %s416
          %s418 = smul.u32 2, %s30
          %s420 = ssub.s32 2048, 2048
          %421 = vsyncadd %s414, %s420
          %s422 = smul.addr %s418, 64
          %s423 = scalar_lea.hbm %s5, %s422
          %s424 = sshll.u32 %s417, 4
          %s425 = int_to_ptr.vmem [resolvable:$true] %s424
          %430 = dma.hbm_to_vmem [thread:$0]  %s423, 2048, %s425, %s414, 512, 128, 8
        $region48: #{tpu_custom_call.1} parent=43 // pred_fallthru
          _
        // Predicated region
        $region49: #{tpu_custom_call.1} parent=43 // pred_check
          %p431 = pneg %p181
        $region50: #{tpu_custom_call.1} parent=43 // pred_check_branch
          %433 = sbr.rel (%p431) target = $region52
        $region51: #{tpu_custom_call.1} parent=43 // pred_region
          %s434 = smul.u32 2, %s30
          %p435 = scmp.lt.s32.totalorder %s434, 7
          %s436 = scalar_select %p435, %s434, 7
          %s437 = scalar_lea.vmem %s6, %s436
          %s438 = smul.u32 2, %s30
        $region52: #{tpu_custom_call.1} parent=43 // pred_fallthru
          _
        // Predicated region
        $region53: #{tpu_custom_call.1} parent=43 // pred_check
          %p439 = pneg %p207
        $region54: #{tpu_custom_call.1} parent=43 // pred_check_branch
          %441 = sbr.rel (%p439) target = $region56
        $region55: #{tpu_custom_call.1} parent=43 // pred_region
          %s442 = sand.u32 %s30, 1
          %s443 = scalar_lea.sflag [#allocation10], %s442
          %s444 = sand.u32 %s197, 1
          %s445 = smul.addr %s444, 2
          %s446 = scalar_lea.vmem [#allocation11], %s445
          %s447 = smul.u32 2, %s30
          %s449 = ssub.s32 32, 32
          %450 = vsyncadd %s443, %s449
          %s451 = smul.addr %s447, 16
          %s452 = scalar_lea.hbm %s7, %s451
          %s454 = sshll.u32 %s446, 4
          %s455 = int_to_ptr.vmem [resolvable:$true] %s454
          %457 = dma.hbm_to_vmem [thread:$0]  %s452, 32, %s455, %s443
        $region56: #{tpu_custom_call.1} parent=43 // pred_fallthru
          _
        // Predicated region
        $region57: #{tpu_custom_call.1} parent=43 // pred_check
          %p458 = pneg %p233
        $region58: #{tpu_custom_call.1} parent=43 // pred_check_branch
          %460 = sbr.rel (%p458) target = $region60
        $region59: #{tpu_custom_call.1} parent=43 // pred_region
          %s461 = sand.u32 %s223, 1
          %s462 = scalar_lea.sflag [#allocation13], %s461
          %s463 = sand.u32 %s223, 1
          %s464 = smul.addr %s463, 128
          %s465 = scalar_lea.vmem [#allocation12], %s464
          %s466 = smul.u32 32, %s30
          %s468 = ssub.s32 2048, 2048
          %469 = vsyncadd %s462, %s468
          %s470 = smul.addr %s466, 64
          %s471 = scalar_lea.hbm %s8, %s470
          %s472 = sshll.u32 %s465, 4
          %s473 = int_to_ptr.vmem [resolvable:$true] %s472
          %478 = dma.hbm_to_vmem [thread:$0]  %s471, 2048, %s473, %s462, 64, 64, 4
        $region60: #{tpu_custom_call.1} parent=43 // pred_fallthru
          _
      $region44: #{tpu_custom_call.1} parent=5 // pred_fallthru
        _
      %p479 = scmp.le.s32.totalorder 1, %s30
      %p480 = scmp.lt.s32.totalorder %s30, 5
      %p481 = pnand %p479, %p480
      %p482 = pneg %p481
      // Predicated region
      $region61: #{tpu_custom_call.1} parent=5 // pred_check
        _
      $region62: #{tpu_custom_call.1} parent=5 // pred_check_branch
        %484 = sbr.rel (%p481) target = $region64
      $region63: #{tpu_custom_call.1} parent=5 // pred_region
        %s485 = ssub.s32 %s30, 1
        // Predicated region
        $region65: #{tpu_custom_call.1} parent=63 // pred_check
          %p486 = pneg %p51
        $region66: #{tpu_custom_call.1} parent=63 // pred_check_branch
          %488 = sbr.rel (%p486) target = $region68
        $region67: #{tpu_custom_call.1} parent=63 // pred_region
          %489 = dma.done [#allocation4], 64
        $region68: #{tpu_custom_call.1} parent=63 // pred_fallthru
          _
        // Predicated region
        $region69: #{tpu_custom_call.1} parent=63 // pred_check
          %p490 = pneg %p72
        $region70: #{tpu_custom_call.1} parent=63 // pred_check_branch
          %492 = sbr.rel (%p490) target = $region72
        $region71: #{tpu_custom_call.1} parent=63 // pred_region
          %493 = dma.done [#allocation7], 64
        $region72: #{tpu_custom_call.1} parent=63 // pred_fallthru
          _
        // Predicated region
        $region73: #{tpu_custom_call.1} parent=63 // pred_check
          %p494 = pneg %p93
        $region74: #{tpu_custom_call.1} parent=63 // pred_check_branch
          %496 = sbr.rel (%p494) target = $region76
        $region75: #{tpu_custom_call.1} parent=63 // pred_region
          %497 = dma.done [#allocation7], 1024
        $region76: #{tpu_custom_call.1} parent=63 // pred_fallthru
          _
        %s498 = sand.u32 %s35, 1
        %s499 = scalar_lea.sflag [#allocation10], %s498
        %s500 = sand.u32 %s148, 1
        %s501 = smul.addr %s500, 128
        %s502 = scalar_lea.vmem [#allocation9], %s501
        // Predicated region
        $region77: #{tpu_custom_call.1} parent=63 // pred_check
          %p503 = pneg %p161
        $region78: #{tpu_custom_call.1} parent=63 // pred_check_branch
          %505 = sbr.rel (%p503) target = $region80
        $region79: #{tpu_custom_call.1} parent=63 // pred_region
          %506 = dma.done %s499, 2048
        $region80: #{tpu_custom_call.1} parent=63 // pred_fallthru
          _
        %s507 = sand.u32 %s35, 1
        %s508 = scalar_lea.sflag [#allocation10], %s507
        %s509 = sand.u32 %s200, 1
        %s510 = smul.addr %s509, 2
        %s511 = scalar_lea.vmem [#allocation11], %s510
        // Predicated region
        $region81: #{tpu_custom_call.1} parent=63 // pred_check
          %p512 = pneg %p213
        $region82: #{tpu_custom_call.1} parent=63 // pred_check_branch
          %514 = sbr.rel (%p512) target = $region84
        $region83: #{tpu_custom_call.1} parent=63 // pred_region
          %515 = dma.done %s508, 32
        $region84: #{tpu_custom_call.1} parent=63 // pred_fallthru
          _
        %s516 = sand.u32 %s226, 1
        %s517 = scalar_lea.sflag [#allocation13], %s516
        %s518 = sand.u32 %s226, 1
        %s519 = smul.addr %s518, 128
        %s520 = scalar_lea.vmem [#allocation12], %s519
        // Predicated region
        $region85: #{tpu_custom_call.1} parent=63 // pred_check
          %p521 = pneg %p239
        $region86: #{tpu_custom_call.1} parent=63 // pred_check_branch
          %523 = sbr.rel (%p521) target = $region88
        $region87: #{tpu_custom_call.1} parent=63 // pred_region
          %524 = dma.done %s517, 2048
        $region88: #{tpu_custom_call.1} parent=63 // pred_fallthru
          _
        %p525 = pneg %p51
        %p526 = pneg %p48
        %p527 = pneg %p72
        %p528 = pneg %p69
        %p529 = pneg %p93
        %p530 = pneg %p90
        %p531 = pneg %p114
        %p532 = pneg %p111
        %p533 = pneg %p135
        %p534 = pneg %p132
        %s535 = sand.u32 %s35, 1
        %s536 = scalar_lea.sflag [#allocation10], %s535
        %s537 = sand.u32 %s148, 1
        %s538 = smul.addr %s537, 128
        %s539 = scalar_lea.vmem [#allocation9], %s538
        %p540 = pneg %p161
        %p541 = pneg %p158
        %s542 = smul.u32 2, %s35
        %p543 = scmp.lt.s32.totalorder %s542, 7
        %s544 = scalar_select %p543, %s542, 7
        %s545 = scalar_lea.vmem %s6, %s544
        %p546 = pneg %p187
        %p547 = pneg %p184
        %s548 = sand.u32 %s35, 1
        %s549 = scalar_lea.sflag [#allocation10], %s548
        %s550 = sand.u32 %s200, 1
        %s551 = smul.addr %s550, 2
        %s552 = scalar_lea.vmem [#allocation11], %s551
        %p553 = pneg %p213
        %p554 = pneg %p210
        %s555 = sand.u32 %s226, 1
        %s556 = scalar_lea.sflag [#allocation13], %s555
        %s557 = sand.u32 %s226, 1
        %s558 = smul.addr %s557, 128
        %s559 = scalar_lea.vmem [#allocation12], %s558
        %p560 = pneg %p239
        %p561 = pneg %p236
        %p562 = pneg %p260
        %p563 = pneg %p257
        %p564 = pneg %p281
        %p565 = pneg %p278
        %p566 = pneg %p302
        %p567 = pneg %p299
        %p568 = pneg %p323
        %p569 = pneg %p320
        %p570 = pneg %p344
        %p571 = pneg %p341
        %s572 = smul.u32 2, %s35
        %s573 = smul.u32 2, %s35
        %p574 = scmp.lt.s32.totalorder %s573, 7
        %s575 = scalar_select %p574, %s573, 7
        %s576 = scalar_lea.vmem %s6, %s575
        %s577 = smul.u32 2, %s35
        %s578 = smul.u32 2, %s35
        %s579 = smul.u32 32, %s35
        %p581 = scmp.eq.s32.totalorder %s35, 0
        // Predicated region
        $region89: #{tpu_custom_call.1} parent=63 // pred_check
          %p582 = pneg %p581
        $region90: #{tpu_custom_call.1} parent=63 // pred_check_branch
          %584 = sbr.rel (%p582) target = $region92
        $region91: #{tpu_custom_call.1} parent=63 // pred_region
          %585 = vst [vmem:[#allocation2] sm:$0xff] 0.0
          %v586 = vld [vmem:[#allocation3] sm:$0xf]
          %v587 = vld [vmem:[#allocation8] sm:$0xf]
          %v588 = vld [vmem:[#allocation8 + $0x4] sm:$0xf]
          %v589 = vld [vmem:[#allocation8 + $0x8] sm:$0xf]
          %v590 = vld [vmem:[#allocation8 + $0xc] sm:$0xf]
          %v591 = vld [vmem:[#allocation8 + $0x10] sm:$0xf]
          %v592 = vld [vmem:[#allocation8 + $0x14] sm:$0xf]
          %v593 = vld [vmem:[#allocation8 + $0x18] sm:$0xf]
          %v594 = vld [vmem:[#allocation8 + $0x1c] sm:$0xf]
          %v595 = vld [vmem:[#allocation8 + $0x20] sm:$0xf]
          %v596 = vld [vmem:[#allocation8 + $0x24] sm:$0xf]
          %v597 = vld [vmem:[#allocation8 + $0x28] sm:$0xf]
          %v598 = vld [vmem:[#allocation8 + $0x2c] sm:$0xf]
          %v599 = vld [vmem:[#allocation8 + $0x30] sm:$0xf]
          %v600 = vld [vmem:[#allocation8 + $0x34] sm:$0xf]
          %v601 = vld [vmem:[#allocation8 + $0x38] sm:$0xf]
          %v602 = vld [vmem:[#allocation8 + $0x3c] sm:$0xf]
          %v619 = vunpack.c.l.b16 %v587
          %v620 = vunpack.c.l.b16 %v588
          %v621 = vunpack.c.l.b16 %v589
          %v622 = vunpack.c.l.b16 %v590
          %v623 = vunpack.c.l.b16 %v591
          %v624 = vunpack.c.l.b16 %v592
          %v625 = vunpack.c.l.b16 %v593
          %v626 = vunpack.c.l.b16 %v594
          %v627 = vunpack.c.l.b16 %v595
          %v628 = vunpack.c.l.b16 %v596
          %v629 = vunpack.c.l.b16 %v597
          %v630 = vunpack.c.l.b16 %v598
          %v631 = vunpack.c.l.b16 %v599
          %v632 = vunpack.c.l.b16 %v600
          %v633 = vunpack.c.l.b16 %v601
          %v634 = vunpack.c.l.b16 %v602
          %v635 = vpack.c.b16 %v620, %v619
          %v636 = vpack.c.b16 %v622, %v621
          %v637 = vpack.c.b16 %v624, %v623
          %v638 = vpack.c.b16 %v626, %v625
          %v639 = vpack.c.b16 %v628, %v627
          %v640 = vpack.c.b16 %v630, %v629
          %v641 = vpack.c.b16 %v632, %v631
          %v642 = vpack.c.b16 %v634, %v633
          %651 = vmatprep.subr.bf16.mxu0 0
          %652 = vmatpush1.bf16.msra.mxu0 %v642
          %653 = vmatprep.subr.bf16.mxu0 0
          %654 = vmatpush1.bf16.msra.mxu0 %v641
          %655 = vmatprep.subr.bf16.mxu0 0
          %656 = vmatpush1.bf16.msra.mxu0 %v640
          %657 = vmatprep.subr.bf16.mxu0 0
          %658 = vmatpush1.bf16.msra.mxu0 %v639
          %659 = vmatprep.subr.bf16.mxu0 0
          %660 = vmatpush1.bf16.msra.mxu0 %v638
          %661 = vmatprep.subr.bf16.mxu0 0
          %662 = vmatpush1.bf16.msra.mxu0 %v637
          %663 = vmatprep.subr.bf16.mxu0 0
          %664 = vmatpush1.bf16.msra.mxu0 %v636
          %665 = vmatprep.subr.bf16.mxu0 0
          %666 = vmatpush1.bf16.msra.mxu0 %v635
          %667 = vmatprep.subr.bf16.mxu0 0
          %668 = vmatpush2.bf16.msra.mxu0 0
          %669 = vmatprep.subr.bf16.mxu0 0
          %670 = vmatpush2.bf16.msra.mxu0 0
          %671 = vmatprep.subr.bf16.mxu0 0
          %672 = vmatpush2.bf16.msra.mxu0 0
          %673 = vmatprep.subr.bf16.mxu0 0
          %674 = vmatpush2.bf16.msra.mxu0 0
          %675 = vmatprep.subr.bf16.mxu0 0
          %676 = vmatpush2.bf16.msra.mxu0 0
          %677 = vmatprep.subr.bf16.mxu0 0
          %678 = vmatpush2.bf16.msra.mxu0 0
          %679 = vmatprep.subr.bf16.mxu0 0
          %680 = vmatpush2.bf16.msra.mxu0 0
          %681 = vmatprep.subr.bf16.mxu0 0
          %682 = vmatpush2.bf16.msra.mxu0 0
          %683 = vmatprep.mubr.bf16.mxu0 0
          %684 = vmatmul.mubr.bf16.gmra.mxu0 %v586
          %v685 = vpop.f32.mrf.mxu0
          %v686 = vadd.f32 0.0, %v685
          %v687 = vpop.f32.mrf.mxu0
          %v688 = vpop.f32.mrf.mxu0
          %v689 = vpop.f32.mrf.mxu0
          %690 = vdwg.mxu0
          %v691 = vld [vmem:[%s3] sm:$0x1]
          %v692 = vld [vmem:[%s4] sm:$0x1]
          %v693 = vrot.slane %v686, 4
          %v694 = vadd.f32 %v686, %v693
          %v695 = vrot.slane %v694, 2
          %v696 = vadd.f32 %v694, %v695
          %v697 = vrot.slane %v696, 1
          %v698 = vadd.f32 %v696, %v697
          %v699 = vrcp.pop 8.0
          %v700 = vmul.f32 %v698, %v699
          %v701 = vmul.f32 %v686, %v686
          %v702 = vrot.slane %v701, 4
          %v703 = vadd.f32 %v701, %v702
          %v704 = vrot.slane %v703, 2
          %v705 = vadd.f32 %v703, %v704
          %v706 = vrot.slane %v705, 1
          %v707 = vadd.f32 %v705, %v706
          %v708 = vmul.f32 %v707, %v699
          %v709 = vmul.f32 %v700, %v700
          %v710 = vsub.f32 %v708, %v709
          %v711 = vmax.f32 %v710, 0.0
          %v712 = vadd.f32 %v711, 1e-05
          %v713 = vrsqrt.pop %v712
          %v714 = vmul.f32 %v691, %v713
          %v716 = vlaneseq
          %v717 = vshrl.u32 %v716, 7
          %v718 = vsub.s32 0, %v717
          %v719 = vrot.slane %v714, %v718
          %v721 = vmul.f32 %v686, %v719
          %v722 = vmul.f32 %v700, %v714
          %v723 = vsub.f32 %v692, %v722
          %v725 = vlaneseq
          %v726 = vshrl.u32 %v725, 7
          %v727 = vsub.s32 0, %v726
          %v728 = vrot.slane %v723, %v727
          %v730 = vadd.f32 %v721, %v728
          %v731 = vmul.f32 %v730, %v730
          %732 = vadd.xlane.f32.xlu0 %v731
          %v733 = vpop.xlane.xlu0 %732
          %v734 = vadd.f32 %v733, 1e-24
          %v735 = vrsqrt.pop %v734
          %v736 = vmul.f32 %v730, %v735
          %v737 = vmul.f32 %v736, 14.285714
          %v738 = vpack.c.bf16 %v737, %v737
          %739 = vst [vmem:[#allocation14] sm:$0xf] %v738
        $region92: #{tpu_custom_call.1} parent=63 // pred_fallthru
          _
        %v740 = vld [vmem:[#allocation6] sm:$0xf]
        %v741 = vld [vmem:[%s502] sm:$0xff]
        %v742 = vld [vmem:[%s502 + $0x8] sm:$0xff]
        %v743 = vld [vmem:[%s502 + $0x10] sm:$0xff]
        %v744 = vld [vmem:[%s502 + $0x18] sm:$0xff]
        %v745 = vld [vmem:[%s502 + $0x20] sm:$0xff]
        %v746 = vld [vmem:[%s502 + $0x28] sm:$0xff]
        %v747 = vld [vmem:[%s502 + $0x30] sm:$0xff]
        %v748 = vld [vmem:[%s502 + $0x38] sm:$0xff]
        %v749 = vld [vmem:[%s502 + $0x40] sm:$0xff]
        %v750 = vld [vmem:[%s502 + $0x48] sm:$0xff]
        %v751 = vld [vmem:[%s502 + $0x50] sm:$0xff]
        %v752 = vld [vmem:[%s502 + $0x58] sm:$0xff]
        %v753 = vld [vmem:[%s502 + $0x60] sm:$0xff]
        %v754 = vld [vmem:[%s502 + $0x68] sm:$0xff]
        %v755 = vld [vmem:[%s502 + $0x70] sm:$0xff]
        %v756 = vld [vmem:[%s502 + $0x78] sm:$0xff]
        %v773 = vunpack.c.l.b16 %v741
        %v774 = vunpack.c.h.b16 %v741
        %v775 = vunpack.c.l.b16 %v742
        %v776 = vunpack.c.h.b16 %v742
        %v777 = vunpack.c.l.b16 %v743
        %v778 = vunpack.c.h.b16 %v743
        %v779 = vunpack.c.l.b16 %v744
        %v780 = vunpack.c.h.b16 %v744
        %v781 = vunpack.c.l.b16 %v745
        %v782 = vunpack.c.h.b16 %v745
        %v783 = vunpack.c.l.b16 %v746
        %v784 = vunpack.c.h.b16 %v746
        %v785 = vunpack.c.l.b16 %v747
        %v786 = vunpack.c.h.b16 %v747
        %v787 = vunpack.c.l.b16 %v748
        %v788 = vunpack.c.h.b16 %v748
        %v789 = vunpack.c.l.b16 %v749
        %v790 = vunpack.c.h.b16 %v749
        %v791 = vunpack.c.l.b16 %v750
        %v792 = vunpack.c.h.b16 %v750
        %v793 = vunpack.c.l.b16 %v751
        %v794 = vunpack.c.h.b16 %v751
        %v795 = vunpack.c.l.b16 %v752
        %v796 = vunpack.c.h.b16 %v752
        %v797 = vunpack.c.l.b16 %v753
        %v798 = vunpack.c.h.b16 %v753
        %v799 = vunpack.c.l.b16 %v754
        %v800 = vunpack.c.h.b16 %v754
        %v801 = vunpack.c.l.b16 %v755
        %v802 = vunpack.c.h.b16 %v755
        %v803 = vunpack.c.l.b16 %v756
        %v804 = vunpack.c.h.b16 %v756
        %v805 = vpack.c.b16 %v775, %v773
        %v806 = vpack.c.b16 %v776, %v774
        %v807 = vpack.c.b16 %v779, %v777
        %v808 = vpack.c.b16 %v780, %v778
        %v809 = vpack.c.b16 %v783, %v781
        %v810 = vpack.c.b16 %v784, %v782
        %v811 = vpack.c.b16 %v787, %v785
        %v812 = vpack.c.b16 %v788, %v786
        %v813 = vpack.c.b16 %v791, %v789
        %v814 = vpack.c.b16 %v792, %v790
        %v815 = vpack.c.b16 %v795, %v793
        %v816 = vpack.c.b16 %v796, %v794
        %v817 = vpack.c.b16 %v799, %v797
        %v818 = vpack.c.b16 %v800, %v798
        %v819 = vpack.c.b16 %v803, %v801
        %v820 = vpack.c.b16 %v804, %v802
        %837 = vmatprep.subr.bf16.mxu0 %v820
        %838 = vmatpush1.bf16.msra.mxu0 %v819
        %839 = vmatprep.subr.bf16.mxu0 %v818
        %840 = vmatpush1.bf16.msra.mxu0 %v817
        %841 = vmatprep.subr.bf16.mxu0 %v816
        %842 = vmatpush1.bf16.msra.mxu0 %v815
        %843 = vmatprep.subr.bf16.mxu0 %v814
        %844 = vmatpush1.bf16.msra.mxu0 %v813
        %845 = vmatprep.subr.bf16.mxu0 %v812
        %846 = vmatpush1.bf16.msra.mxu0 %v811
        %847 = vmatprep.subr.bf16.mxu0 %v810
        %848 = vmatpush1.bf16.msra.mxu0 %v809
        %849 = vmatprep.subr.bf16.mxu0 %v808
        %850 = vmatpush1.bf16.msra.mxu0 %v807
        %851 = vmatprep.subr.bf16.mxu0 %v806
        %852 = vmatpush1.bf16.msra.mxu0 %v805
        %853 = vmatprep.subr.bf16.mxu0 0
        %854 = vmatpush2.bf16.msra.mxu0 0
        %855 = vmatprep.subr.bf16.mxu0 0
        %856 = vmatpush2.bf16.msra.mxu0 0
        %857 = vmatprep.subr.bf16.mxu0 0
        %858 = vmatpush2.bf16.msra.mxu0 0
        %859 = vmatprep.subr.bf16.mxu0 0
        %860 = vmatpush2.bf16.msra.mxu0 0
        %861 = vmatprep.subr.bf16.mxu0 0
        %862 = vmatpush2.bf16.msra.mxu0 0
        %863 = vmatprep.subr.bf16.mxu0 0
        %864 = vmatpush2.bf16.msra.mxu0 0
        %865 = vmatprep.subr.bf16.mxu0 0
        %866 = vmatpush2.bf16.msra.mxu0 0
        %867 = vmatprep.subr.bf16.mxu0 0
        %868 = vmatpush2.bf16.msra.mxu0 0
        %869 = vmatprep.mubr.bf16.mxu0 0
        %870 = vmatmul.mubr.bf16.gmra.mxu0 %v740
        %v871 = vpop.f32.mrf.mxu0
        %v872 = vadd.f32 0.0, %v871
        %v873 = vpop.f32.mrf.mxu0
        %v874 = vadd.f32 0.0, %v873
        %v875 = vpop.f32.mrf.mxu0
        %v876 = vpop.f32.mrf.mxu0
        %877 = vdwg.mxu0
        %v878 = vld [vmem:[%s576] sm:$0x3]
        %v879 = vld [vmem:[%s511] sm:$0x3]
        %v880 = vrot.slane %v872, 4
        %v881 = vadd.f32 %v872, %v880
        %v882 = vrot.slane %v881, 2
        %v883 = vadd.f32 %v881, %v882
        %v884 = vrot.slane %v883, 1
        %v885 = vadd.f32 %v883, %v884
        %v886 = vrot.slane %v874, 4
        %v887 = vadd.f32 %v874, %v886
        %v888 = vrot.slane %v887, 2
        %v889 = vadd.f32 %v887, %v888
        %v890 = vrot.slane %v889, 1
        %v891 = vadd.f32 %v889, %v890
        %v892 = vrcp.pop 8.0
        %v893 = vmul.f32 %v885, %v892
        %v894 = vmul.f32 %v891, %v892
        %v895 = vmul.f32 %v872, %v872
        %v896 = vmul.f32 %v874, %v874
        %v897 = vrot.slane %v895, 4
        %v898 = vadd.f32 %v895, %v897
        %v899 = vrot.slane %v898, 2
        %v900 = vadd.f32 %v898, %v899
        %v901 = vrot.slane %v900, 1
        %v902 = vadd.f32 %v900, %v901
        %v903 = vrot.slane %v896, 4
        %v904 = vadd.f32 %v896, %v903
        %v905 = vrot.slane %v904, 2
        %v906 = vadd.f32 %v904, %v905
        %v907 = vrot.slane %v906, 1
        %v908 = vadd.f32 %v906, %v907
        %v909 = vmul.f32 %v902, %v892
        %v910 = vmul.f32 %v908, %v892
        %v911 = vmul.f32 %v893, %v893
        %v912 = vmul.f32 %v894, %v894
        %v913 = vsub.f32 %v909, %v911
        %v914 = vsub.f32 %v910, %v912
        %v915 = vmax.f32 %v913, 0.0
        %v916 = vmax.f32 %v914, 0.0
        %v917 = vadd.f32 %v915, 1e-05
        %v918 = vadd.f32 %v916, 1e-05
        %v919 = vrsqrt.pop %v917
        %v920 = vrsqrt.pop %v918
        %v923 = vcombine.low %v919, %v920
        %v925 = vunpack.c.l.s4 1966171168
        %v926 = vunpack.c.0.s8 %v925
        %v927 = vlaneseq
        %v928 = vshrl.u32 %v927, 7
        %v929 = vsub.s32 %v926, %v928
        %v930 = vrot.slane %v923, %v929
        %v932 = vunpack.c.l.s4 1966171168
        %v933 = vunpack.c.0.s8 %v932
        %v934 = vlaneseq
        %v935 = vshrl.u32 %v934, 7
        %v936 = vsub.s32 %v933, %v935
        %v937 = vrot.slane %v930, %v936
        %v939 = vmul.f32 %v878, %v937
        %v941 = vlaneseq
        %v942 = vshrl.u32 %v941, 7
        %v943 = vsub.s32 0, %v942
        %v944 = vrot.slane %v939, %v943
        %v945 = vlaneseq
        %v946 = vshrl.u32 %v945, 7
        %v947 = vsub.s32 1, %v946
        %v948 = vrot.slane %v939, %v947
        %v951 = vmul.f32 %v872, %v944
        %v952 = vmul.f32 %v874, %v948
        %v953 = vmul.f32 %v893, %v944
        %v954 = vmul.f32 %v894, %v948
        %v957 = vcombine.low %v953, %v954
        %v959 = vunpack.c.l.s4 1966171168
        %v960 = vunpack.c.0.s8 %v959
        %v961 = vlaneseq
        %v962 = vshrl.u32 %v961, 7
        %v963 = vsub.s32 %v960, %v962
        %v964 = vrot.slane %v957, %v963
        %v966 = vunpack.c.l.s4 1966171168
        %v967 = vunpack.c.0.s8 %v966
        %v968 = vlaneseq
        %v969 = vshrl.u32 %v968, 7
        %v970 = vsub.s32 %v967, %v969
        %v971 = vrot.slane %v964, %v970
        %v973 = vsub.f32 %v879, %v971
        %v975 = vlaneseq
        %v976 = vshrl.u32 %v975, 7
        %v977 = vsub.s32 0, %v976
        %v978 = vrot.slane %v973, %v977
        %v979 = vlaneseq
        %v980 = vshrl.u32 %v979, 7
        %v981 = vsub.s32 1, %v980
        %v982 = vrot.slane %v973, %v981
        %v985 = vadd.f32 %v951, %v978
        %v986 = vadd.f32 %v952, %v982
        %v987 = vmax.f32 %v985, 0.0
        %v988 = vmax.f32 %v986, 0.0
        %v989 = vld [vmem:[#allocation2] sm:$0xff]
        %v990 = vpack.c.bf16 %v987, %v987
        %v991 = vpack.c.bf16 %v988, %v988
        %v992 = vld [vmem:[%s520] sm:$0xf]
        %v993 = vld [vmem:[%s520 + $0x4] sm:$0xf]
        %v994 = vld [vmem:[%s520 + $0x8] sm:$0xf]
        %v995 = vld [vmem:[%s520 + $0xc] sm:$0xf]
        %v996 = vld [vmem:[%s520 + $0x10] sm:$0xf]
        %v997 = vld [vmem:[%s520 + $0x14] sm:$0xf]
        %v998 = vld [vmem:[%s520 + $0x18] sm:$0xf]
        %v999 = vld [vmem:[%s520 + $0x1c] sm:$0xf]
        %v1000 = vld [vmem:[%s520 + $0x20] sm:$0xf]
        %v1001 = vld [vmem:[%s520 + $0x24] sm:$0xf]
        %v1002 = vld [vmem:[%s520 + $0x28] sm:$0xf]
        %v1003 = vld [vmem:[%s520 + $0x2c] sm:$0xf]
        %v1004 = vld [vmem:[%s520 + $0x30] sm:$0xf]
        %v1005 = vld [vmem:[%s520 + $0x34] sm:$0xf]
        %v1006 = vld [vmem:[%s520 + $0x38] sm:$0xf]
        %v1007 = vld [vmem:[%s520 + $0x3c] sm:$0xf]
        %v1008 = vld [vmem:[%s520 + $0x40] sm:$0xf]
        %v1009 = vld [vmem:[%s520 + $0x44] sm:$0xf]
        %v1010 = vld [vmem:[%s520 + $0x48] sm:$0xf]
        %v1011 = vld [vmem:[%s520 + $0x4c] sm:$0xf]
        %v1012 = vld [vmem:[%s520 + $0x50] sm:$0xf]
        %v1013 = vld [vmem:[%s520 + $0x54] sm:$0xf]
        %v1014 = vld [vmem:[%s520 + $0x58] sm:$0xf]
        %v1015 = vld [vmem:[%s520 + $0x5c] sm:$0xf]
        %v1016 = vld [vmem:[%s520 + $0x60] sm:$0xf]
        %v1017 = vld [vmem:[%s520 + $0x64] sm:$0xf]
        %v1018 = vld [vmem:[%s520 + $0x68] sm:$0xf]
        %v1019 = vld [vmem:[%s520 + $0x6c] sm:$0xf]
        %v1020 = vld [vmem:[%s520 + $0x70] sm:$0xf]
        %v1021 = vld [vmem:[%s520 + $0x74] sm:$0xf]
        %v1022 = vld [vmem:[%s520 + $0x78] sm:$0xf]
        %v1023 = vld [vmem:[%s520 + $0x7c] sm:$0xf]
        %v1056 = vunpack.c.l.b16 %v992
        %v1057 = vunpack.c.l.b16 %v993
        %v1058 = vunpack.c.l.b16 %v994
        %v1059 = vunpack.c.l.b16 %v995
        %v1060 = vunpack.c.l.b16 %v996
        %v1061 = vunpack.c.l.b16 %v997
        %v1062 = vunpack.c.l.b16 %v998
        %v1063 = vunpack.c.l.b16 %v999
        %v1064 = vunpack.c.l.b16 %v1000
        %v1065 = vunpack.c.l.b16 %v1001
        %v1066 = vunpack.c.l.b16 %v1002
        %v1067 = vunpack.c.l.b16 %v1003
        %v1068 = vunpack.c.l.b16 %v1004
        %v1069 = vunpack.c.l.b16 %v1005
        %v1070 = vunpack.c.l.b16 %v1006
        %v1071 = vunpack.c.l.b16 %v1007
        %v1072 = vunpack.c.l.b16 %v1008
        %v1073 = vunpack.c.l.b16 %v1009
        %v1074 = vunpack.c.l.b16 %v1010
        %v1075 = vunpack.c.l.b16 %v1011
        %v1076 = vunpack.c.l.b16 %v1012
        %v1077 = vunpack.c.l.b16 %v1013
        %v1078 = vunpack.c.l.b16 %v1014
        %v1079 = vunpack.c.l.b16 %v1015
        %v1080 = vunpack.c.l.b16 %v1016
        %v1081 = vunpack.c.l.b16 %v1017
        %v1082 = vunpack.c.l.b16 %v1018
        %v1083 = vunpack.c.l.b16 %v1019
        %v1084 = vunpack.c.l.b16 %v1020
        %v1085 = vunpack.c.l.b16 %v1021
        %v1086 = vunpack.c.l.b16 %v1022
        %v1087 = vunpack.c.l.b16 %v1023
        %v1088 = vpack.c.b16 %v1057, %v1056
        %v1089 = vpack.c.b16 %v1059, %v1058
        %v1090 = vpack.c.b16 %v1061, %v1060
        %v1091 = vpack.c.b16 %v1063, %v1062
        %v1092 = vpack.c.b16 %v1065, %v1064
        %v1093 = vpack.c.b16 %v1067, %v1066
        %v1094 = vpack.c.b16 %v1069, %v1068
        %v1095 = vpack.c.b16 %v1071, %v1070
        %v1096 = vpack.c.b16 %v1073, %v1072
        %v1097 = vpack.c.b16 %v1075, %v1074
        %v1098 = vpack.c.b16 %v1077, %v1076
        %v1099 = vpack.c.b16 %v1079, %v1078
        %v1100 = vpack.c.b16 %v1081, %v1080
        %v1101 = vpack.c.b16 %v1083, %v1082
        %v1102 = vpack.c.b16 %v1085, %v1084
        %v1103 = vpack.c.b16 %v1087, %v1086
        %1120 = vmatprep.subr.bf16.mxu0 0
        %1121 = vmatpush1.bf16.msra.mxu0 %v1095
        %1122 = vmatprep.subr.bf16.mxu0 0
        %1123 = vmatpush1.bf16.msra.mxu0 %v1094
        %1124 = vmatprep.subr.bf16.mxu0 0
        %1125 = vmatpush1.bf16.msra.mxu0 %v1093
        %1126 = vmatprep.subr.bf16.mxu0 0
        %1127 = vmatpush1.bf16.msra.mxu0 %v1092
        %1128 = vmatprep.subr.bf16.mxu0 0
        %1129 = vmatpush1.bf16.msra.mxu0 %v1091
        %1130 = vmatprep.subr.bf16.mxu0 0
        %1131 = vmatpush1.bf16.msra.mxu0 %v1090
        %1132 = vmatprep.subr.bf16.mxu0 0
        %1133 = vmatpush1.bf16.msra.mxu0 %v1089
        %1134 = vmatprep.subr.bf16.mxu0 0
        %1135 = vmatpush1.bf16.msra.mxu0 %v1088
        %1136 = vmatprep.subr.bf16.mxu0 0
        %1137 = vmatpush2.bf16.msra.mxu0 %v1103
        %1138 = vmatprep.subr.bf16.mxu0 0
        %1139 = vmatpush2.bf16.msra.mxu0 %v1102
        %1140 = vmatprep.subr.bf16.mxu0 0
        %1141 = vmatpush2.bf16.msra.mxu0 %v1101
        %1142 = vmatprep.subr.bf16.mxu0 0
        %1143 = vmatpush2.bf16.msra.mxu0 %v1100
        %1144 = vmatprep.subr.bf16.mxu0 0
        %1145 = vmatpush2.bf16.msra.mxu0 %v1099
        %1146 = vmatprep.subr.bf16.mxu0 0
        %1147 = vmatpush2.bf16.msra.mxu0 %v1098
        %1148 = vmatprep.subr.bf16.mxu0 0
        %1149 = vmatpush2.bf16.msra.mxu0 %v1097
        %1150 = vmatprep.subr.bf16.mxu0 0
        %1151 = vmatpush2.bf16.msra.mxu0 %v1096
        %1152 = vmatprep.mubr.bf16.mxu0 %v991
        %1153 = vmatmul.mubr.bf16.gmra.mxu0 %v990
        %v1154 = vpop.f32.mrf.mxu0
        %v1155 = vadd.f32 0.0, %v1154
        %v1156 = vpop.f32.mrf.mxu0
        %v1157 = vpop.f32.mrf.mxu0
        %v1158 = vpop.f32.mrf.mxu0
        %1159 = vdwg.mxu0
        %v1160 = vadd.f32 %v989, %v1155
        %1161 = vst [vmem:[#allocation2] sm:$0xff] %v1160
        %p1162 = scmp.eq.s32.totalorder %s35, 3
        // Predicated region
        $region93: #{tpu_custom_call.1} parent=63 // pred_check
          %p1163 = pneg %p1162
        $region94: #{tpu_custom_call.1} parent=63 // pred_check_branch
          %1165 = sbr.rel (%p1163) target = $region96
        $region95: #{tpu_custom_call.1} parent=63 // pred_region
          %v1166 = vld [vmem:[#allocation2] sm:$0xff]
          %v1167 = vld [vmem:[%s9] sm:$0x1]
          %v1168 = vld [vmem:[%s10] sm:$0x1]
          %v1169 = vrot.slane %v1166, 4
          %v1170 = vadd.f32 %v1166, %v1169
          %v1171 = vrot.slane %v1170, 2
          %v1172 = vadd.f32 %v1170, %v1171
          %v1173 = vrot.slane %v1172, 1
          %v1174 = vadd.f32 %v1172, %v1173
          %v1175 = vmul.f32 %v1174, %v892
          %v1176 = vmul.f32 %v1166, %v1166
          %v1177 = vrot.slane %v1176, 4
          %v1178 = vadd.f32 %v1176, %v1177
          %v1179 = vrot.slane %v1178, 2
          %v1180 = vadd.f32 %v1178, %v1179
          %v1181 = vrot.slane %v1180, 1
          %v1182 = vadd.f32 %v1180, %v1181
          %v1183 = vmul.f32 %v1182, %v892
          %v1184 = vmul.f32 %v1175, %v1175
          %v1185 = vsub.f32 %v1183, %v1184
          %v1186 = vmax.f32 %v1185, 0.0
          %v1187 = vadd.f32 %v1186, 1e-05
          %v1188 = vrsqrt.pop %v1187
          %v1189 = vmul.f32 %v1167, %v1188
          %v1191 = vlaneseq
          %v1192 = vshrl.u32 %v1191, 7
          %v1193 = vsub.s32 0, %v1192
          %v1194 = vrot.slane %v1189, %v1193
          %v1196 = vmul.f32 %v1166, %v1194
          %v1197 = vmul.f32 %v1175, %v1189
          %v1198 = vsub.f32 %v1168, %v1197
          %v1200 = vlaneseq
          %v1201 = vshrl.u32 %v1200, 7
          %v1202 = vsub.s32 0, %v1201
          %v1203 = vrot.slane %v1198, %v1202
          %v1205 = vadd.f32 %v1196, %v1203
          %v1206 = vmul.f32 %v1205, %v1205
          %1207 = vadd.xlane.f32.xlu0 %v1206
          %v1208 = vpop.xlane.xlu0 %1207
          %v1209 = vadd.f32 %v1208, 1e-24
          %v1210 = vrsqrt.pop %v1209
          %v1211 = vmul.f32 %v1205, %v1210
          %v1212 = vpack.c.bf16 %v1211, %v1211
          %1213 = vst [vmem:[#allocation15] sm:$0xf] %v1212
          %v1214 = vld [vmem:[#allocation14] sm:$0xf]
          %v1215 = vunpack.c.l.bf16 %v1214
          %v1216 = vunpack.c.l.bf16 %v1212
          %v1217 = vrot.slane %v1216, 4
          %v1218 = vmul.f32 %v1215, %v1217
          %1219 = vadd.xlane.f32.xlu0 %v1218
          %v1220 = vpop.xlane.xlu0 %1219
          %vm1221 = vcmask 7168
          %1222 = vst.msk [vmem:[%s13] sm:$0xff] %vm1221, %v1220
        $region96: #{tpu_custom_call.1} parent=63 // pred_fallthru
          _
        // Predicated region
        $region97: #{tpu_custom_call.1} parent=63 // pred_check
          %p1223 = pneg %p299
        $region98: #{tpu_custom_call.1} parent=63 // pred_check_branch
          %1225 = sbr.rel (%p1223) target = $region100
        $region99: #{tpu_custom_call.1} parent=63 // pred_region
          %s1227 = ssub.s32 64, 64
          %1228 = vsyncadd [#allocation5], %s1227
          %s1230 = sshll.u32 [#allocation14], 4
          %s1231 = int_to_ptr.vmem [resolvable:$true] %s1230
          %1233 = dma.vmem_to_hbm [thread:$0]  %s1231, 64, %s11, [#allocation5]
        $region100: #{tpu_custom_call.1} parent=63 // pred_fallthru
          _
        // Predicated region
        $region101: #{tpu_custom_call.1} parent=63 // pred_check
          %p1234 = pneg %p320
        $region102: #{tpu_custom_call.1} parent=63 // pred_check_branch
          %1236 = sbr.rel (%p1234) target = $region104
        $region103: #{tpu_custom_call.1} parent=63 // pred_region
          %s1238 = ssub.s32 64, 64
          %1239 = vsyncadd [#allocation16], %s1238
          %s1241 = sshll.u32 [#allocation15], 4
          %s1242 = int_to_ptr.vmem [resolvable:$true] %s1241
          %1244 = dma.vmem_to_hbm [thread:$0]  %s1242, 64, %s12, [#allocation16]
        $region104: #{tpu_custom_call.1} parent=63 // pred_fallthru
          _
        // Predicated region
        $region105: #{tpu_custom_call.1} parent=63 // pred_check
          %p1245 = pneg %p341
        $region106: #{tpu_custom_call.1} parent=63 // pred_check_branch
          %1247 = sbr.rel (%p1245) target = $region108
        $region107: #{tpu_custom_call.1} parent=63 // pred_region
          _
        $region108: #{tpu_custom_call.1} parent=63 // pred_fallthru
          _
        // Predicated region
        $region109: #{tpu_custom_call.1} parent=63 // pred_check
          %p1248 = pneg %p299
        $region110: #{tpu_custom_call.1} parent=63 // pred_check_branch
          %1250 = sbr.rel (%p1248) target = $region112
        $region111: #{tpu_custom_call.1} parent=63 // pred_region
          %1251 = dma.done [#allocation5], 64
        $region112: #{tpu_custom_call.1} parent=63 // pred_fallthru
          _
        // Predicated region
        $region113: #{tpu_custom_call.1} parent=63 // pred_check
          %p1252 = pneg %p320
        $region114: #{tpu_custom_call.1} parent=63 // pred_check_branch
          %1254 = sbr.rel (%p1252) target = $region116
        $region115: #{tpu_custom_call.1} parent=63 // pred_region
          %1255 = dma.done [#allocation16], 64
        $region116: #{tpu_custom_call.1} parent=63 // pred_fallthru
          _
        // Predicated region
        $region117: #{tpu_custom_call.1} parent=63 // pred_check
          %p1256 = pneg %p341
        $region118: #{tpu_custom_call.1} parent=63 // pred_check_branch
          %1258 = sbr.rel (%p1256) target = $region120
        $region119: #{tpu_custom_call.1} parent=63 // pred_region
          _
        $region120: #{tpu_custom_call.1} parent=63 // pred_fallthru
          _
      $region64: #{tpu_custom_call.1} parent=5 // pred_fallthru
        _
      %p1259 = scmp.le.s32.totalorder 2, %s30
      // Predicated region
      $region121: #{tpu_custom_call.1} parent=5 // pred_check
        %p1260 = pneg %p1259
      $region122: #{tpu_custom_call.1} parent=5 // pred_check_branch
        %1262 = sbr.rel (%p1260) target = $region124
      $region123: #{tpu_custom_call.1} parent=5 // pred_region
        %s1263 = ssub.s32 %s30, 2
      $region124: #{tpu_custom_call.1} parent=5 // pred_fallthru
        _
    $region6: #{tpu_custom_call.1} parent=1 // loop_footer
      %s34 = sadd.s32 1, %s30
    $region7: #{tpu_custom_call.1} parent=1 // loop_footer_branch
      %29 = sbr.rel target = $region3
    $region8: #{tpu_custom_call.1} parent=1 // loop_exit
      _
    %1264 = vsyncpa [#allocation4], 1
    %s1265 = scalar_lea.sflag [#allocation4], 1
    %1266 = vsyncpa %s1265, 1
    %1267 = vsyncpa [#allocation7], 1
    %1268 = vsyncpa [#allocation10], 1
    %s1269 = scalar_lea.sflag [#allocation10], 1
    %1270 = vsyncpa %s1269, 1
    %1271 = vsyncpa [#allocation13], 1
    %s1272 = scalar_lea.sflag [#allocation13], 1
    %1273 = vsyncpa %s1272, 1
    %1274 = vsyncpa [#allocation5], 1
    %s1275 = scalar_lea.sflag [#allocation5], 1
    %1276 = vsyncpa %s1275, 1
    %1277 = vsyncpa [#allocation16], 1

</llo_original>
